<compile_context>
chip_gen: v5e
topology: v5e:2x2
jax: 0.10.0
libtpu: 0.0.40
codegen_flags: <defaults>
</compile_context>

<pallas_src>
import math
import functools

import jax
import jax.numpy as jnp
from jax.experimental import pallas as pl
from jax.experimental.pallas import tpu as pltpu


def _silu(v):
    return v * (1.0 / (1.0 + jnp.exp(-v)))


def _softplus(v):
    return jnp.maximum(v, 0.0) + jnp.log1p(jnp.exp(-jnp.abs(v)))


def _mamba_block_kernel(
    x_ref,        # (1, L, Bblk, D)  f32   l-major inside the block
    win_xz_ref,   # (D, 2E)   bf16  in_proj weight (x||z), transposed
    convw_ref,    # (K, E)    f32   depthwise conv taps (tap index first)
    convb_ref,    # (1, E)    f32
    wx_ref,       # (E, R+2N) bf16  x_proj weight transposed: [dt_low | B | C]
    wdt_ref,      # (R, E)    bf16  dt_proj weight transposed (kept low-rank)
    dtb_ref,      # (1, E)    f32   dt_proj bias
    alogt_ref,    # (N, E)    f32   A_log transposed
    dprm_ref,     # (1, E)    f32   D skip parameter
    wout_ref,     # (E, D)    bf16  out_proj weight, transposed
    o_ref,        # (1, L, Bblk, D) f32
    *,
    n_state,
    dt_rank,
    e_chunk,
):
    _, L, Bblk, D = x_ref.shape
    K, E = convw_ref.shape
    N = n_state
    R = dt_rank
    BL = Bblk * L

    # Row r = l*Bblk + b: per-timestep slices across the folded batch are
    # contiguous sublane slabs (the wrapper already reordered x this way).
    xb = x_ref[...].reshape(BL, D)

    # ---- in_proj: one (BL, D) @ (D, 2E) bf16 matmul, f32 accumulation ----
    xz = jnp.dot(xb.astype(jnp.bfloat16), win_xz_ref[...],
                 preferred_element_type=jnp.float32)                # (BL, 2E)
    xi = xz[:, :E]
    z = xz[:, E:]

    # ---- causal depthwise conv: one zero-pad + K static shifted slices ----
    # out[l] = sum_k w[k] * x[l + k - (K-1)]   (zeros for l + k - (K-1) < 0)
    pad = (K - 1) * Bblk
    xpad = jnp.concatenate([jnp.zeros((pad, E), jnp.float32), xi], axis=0)
    convw = convw_ref[...]
    acc = xi * convw[K - 1:K, :]
    for k in range(K - 1):
        acc = acc + xpad[k * Bblk:k * Bblk + BL, :] * convw[k:k + 1, :]
    xc = _silu(acc + convb_ref[...])                                 # (BL, E)

    # ---- fused x_proj: one matmul yields dt_low || B || C ----
    xc_b = xc.astype(jnp.bfloat16)
    xdbl = jnp.dot(xc_b, wx_ref[...], preferred_element_type=jnp.float32)
    dt_low = xdbl[:, :R]                                             # (BL, R)
    Bm = xdbl[:, R:R + N]                                            # (BL, N)
    Cm = xdbl[:, R + N:R + 2 * N]                                    # (BL, N)

    # ---- low-rank dt projection (R x E, NOT fused into an (E,E) weight) ----
    delta = _softplus(
        jnp.dot(dt_low.astype(jnp.bfloat16), wdt_ref[...],
                preferred_element_type=jnp.float32) + dtb_ref[...])  # (BL, E)

    u = delta * xc                                                   # (BL, E)
    a_t = -jnp.exp(alogt_ref[...])                                   # (N, E)

    # ---- selective scan: vectorized over batch, chunked along E ----
    y_chunks = []
    for e0 in range(0, E, e_chunk):
        ec = min(e_chunk, E - e0)
        a_c = a_t[:, e0:e0 + ec]                                     # (N, ec)
        d_c = delta[:, e0:e0 + ec]                                   # (BL, ec)
        u_c = u[:, e0:e0 + ec]                                       # (BL, ec)
        # Bulk precompute: the serial loop below is pure FMA + C reduction.
        dA = jnp.exp(d_c[:, None, :] * a_c[None, :, :])              # (BL, N, ec)
        Bx = Bm[:, :, None] * u_c[:, None, :]                        # (BL, N, ec)

        h = jnp.zeros((Bblk, N, ec), jnp.float32)
        rows = []
        for l in range(L):   # TODO(synk): fori_loop over L-chunks for long L
            lo = l * Bblk
            h = dA[lo:lo + Bblk] * h + Bx[lo:lo + Bblk]              # VPU FMA
            c_l = Cm[lo:lo + Bblk]                                   # (Bblk, N)
            rows.append(jnp.sum(c_l[:, :, None] * h, axis=1))        # (Bblk, ec)
        y_chunks.append(jnp.concatenate(rows, axis=0))               # (BL, ec)
    ys = y_chunks[0] if len(y_chunks) == 1 else jnp.concatenate(y_chunks, axis=1)

    # ---- D skip, silu(z) gate (in-register), out_proj, single dense store ----
    y = (ys + xc * dprm_ref[...]) * _silu(z)                         # (BL, E)
    out = jnp.dot(y.astype(jnp.bfloat16), wout_ref[...],
                  preferred_element_type=jnp.float32)                # (BL, D)
    # TODO(synk): at D < 128 this one bulk store is still lane-masked; it is
    # lane-dense at production D >= 128.
    o_ref[...] = out.reshape(1, L, Bblk, D)


def mamba_block_pallas(x, params, *, d_conv, batch_block=None, e_chunk=512):
    B, L, D = x.shape
    w_in = params["in_proj_w"]                       # (2E, D)
    E = w_in.shape[0] // 2
    R = params["dt_proj_w"].shape[1]
    N = params["A_log"].shape[1]
    K = d_conv

    if batch_block is None:
        # grid >= 2: one block per v7x TensorCore and double-buffered x / out
        # DMAs; otherwise keep Bblk (matmul M dim = Bblk*L) as large as B allows.
        batch_block = B // 2 if (B >= 2 and B % 2 == 0) else B
    Bblk = batch_block
    assert B % Bblk == 0, "batch must be divisible by batch_block"
    n_blocks = B // Bblk
    e_chunk = max(1, min(e_chunk, E))

    # ---- weight preprocessing (plain XLA, outside the kernel) ----
    # MXU operands go to VMEM in bf16; purely elementwise params stay f32.
    win_xz = w_in.T.astype(jnp.bfloat16)                             # (D, 2E)
    conv_w = jnp.transpose(params["conv_w"][:, 0, :], (1, 0)).astype(jnp.float32)  # (K, E)
    conv_b = params["conv_b"][None, :].astype(jnp.float32)           # (1, E)
    wx_t = params["x_proj_w"].T.astype(jnp.bfloat16)                 # (E, R+2N)
    wdt_t = params["dt_proj_w"].T.astype(jnp.bfloat16)               # (R, E)
    dtb = params["dt_proj_b"][None, :].astype(jnp.float32)           # (1, E)
    alogt = params["A_log"].T.astype(jnp.float32)                    # (N, E)
    dprm = params["D"][None, :].astype(jnp.float32)                  # (1, E)
    wout = params["out_proj_w"].T.astype(jnp.bfloat16)               # (E, D)
    weights = [win_xz, conv_w, conv_b, wx_t, wdt_t, dtb, alogt, dprm, wout]

    # l-major layout inside each batch block: (n_blocks, L, Bblk, D).
    xg = x.reshape(n_blocks, Bblk, L, D).transpose(0, 2, 1, 3)

    # ---- VMEM budget derived from actual block / weight / activation sizes ----
    BL = Bblk * L
    blk_bytes = Bblk * L * D * 4
    w_bytes = sum(int(a.size) * a.dtype.itemsize for a in weights)
    act_bytes = 4 * (BL * (2 * E + 6 * E + (R + 2 * N) + 2 * D)
                     + 2 * BL * N * e_chunk + (K - 1) * Bblk * E)
    vmem_est = 2 * 2 * blk_bytes + 2 * w_bytes + 2 * act_bytes
    vmem_limit = int(min(100 * 2**20, max(16 * 2**20, 2 * vmem_est)))

    def full_spec(a):
        nd = a.ndim
        return pl.BlockSpec(a.shape, lambda g, nd=nd: (0,) * nd)

    grid_spec = pltpu.PrefetchScalarGridSpec(
        num_scalar_prefetch=0,
        grid=(n_blocks,),
        in_specs=[pl.BlockSpec((1, L, Bblk, D), lambda g: (g, 0, 0, 0))]
                 + [full_spec(a) for a in weights],
        out_specs=pl.BlockSpec((1, L, Bblk, D), lambda g: (g, 0, 0, 0)),
    )

    kernel = functools.partial(_mamba_block_kernel,
                               n_state=N, dt_rank=R, e_chunk=e_chunk)

    out = pl.pallas_call(
        kernel,
        out_shape=jax.ShapeDtypeStruct((n_blocks, L, Bblk, D), jnp.float32),
        grid_spec=grid_spec,
        compiler_params=pltpu.CompilerParams(
            dimension_semantics=("parallel",),     # batch blocks are independent
            vmem_limit_bytes=vmem_limit),
    )(xg, *weights)
    return out.transpose(0, 2, 1, 3).reshape(B, L, D)


def mamba_block_ref(x, params, *, d_conv):
    """Pure-JAX f32 reference mirroring the PyTorch module exactly."""
    B, L, D = x.shape
    w_in = params["in_proj_w"]
    E = w_in.shape[0] // 2
    R = params["dt_proj_w"].shape[1]
    N = params["A_log"].shape[1]
    K = d_conv

    xz = x @ w_in.T
    xi, z = xz[..., :E], xz[..., E:]
    xpad = jnp.pad(xi, ((0, 0), (K - 1, 0), (0, 0)))
    conv_w = params["conv_w"][:, 0, :]               # (E, K)
    conv = jnp.zeros_like(xi)
    for k in range(K):
        conv = conv + xpad[:, k:k + L, :] * conv_w[:, k][None, None, :]
    conv = conv + params["conv_b"][None, None, :]
    xc = jax.nn.silu(conv)

    x_dbl = xc @ params["x_proj_w"].T
    dt_low = x_dbl[..., :R]
    Bm = x_dbl[..., R:R + N]
    Cm = x_dbl[..., R + N:]
    delta = jax.nn.softplus(dt_low @ params["dt_proj_w"].T + params["dt_proj_b"])
    A = -jnp.exp(params["A_log"])                    # (E, N)

    A_bar = jnp.exp(jnp.einsum("bld,dn->bdln", delta, A))
    B_bar = jnp.einsum("bld,bln->bdln", delta, Bm)
    Bx = jnp.einsum("bdln,bld->bdln", B_bar, xc)
    h = jnp.zeros((B, E, N), jnp.float32)
    ys = []
    for i in range(L):
        h = A_bar[:, :, i] * h + Bx[:, :, i]
        ys.append(jnp.einsum("bdn,bn->bd", h, Cm[:, i, :]))
    y = jnp.stack(ys, axis=1)
    y = y + xc * params["D"][None, None, :]
    y = y * jax.nn.silu(z)
    return y @ params["out_proj_w"].T


if __name__ == "__main__":
    # Args(d_model=32, ...) => d_inner=64, dt_rank=2, d_state=16, d_conv=4
    d_model = 32
    d_conv = 4
    d_state = 16
    expand = 2
    d_inner = expand * d_model
    dt_rank = math.ceil(d_model / 16)
    Bsz, L = 4, 8          # B=4 -> default Bblk=2 -> grid=(2,)

    key = jax.random.PRNGKey(0)
    ks = jax.random.split(key, 8)
    s = 0.1
    params = {
        "in_proj_w": jax.random.normal(ks[0], (2 * d_inner, d_model), jnp.float32) * s,
        "conv_w": jax.random.normal(ks[1], (d_inner, 1, d_conv), jnp.float32) * s,
        "conv_b": jax.random.normal(ks[2], (d_inner,), jnp.float32) * s,
        "x_proj_w": jax.random.normal(ks[3], (dt_rank + 2 * d_state, d_inner), jnp.float32) * s,
        "dt_proj_w": jax.random.normal(ks[4], (d_inner, dt_rank), jnp.float32) * s,
        "dt_proj_b": jax.random.normal(ks[5], (d_inner,), jnp.float32) * s,
        "A_log": jnp.log(jnp.tile(jnp.arange(1, d_state + 1, dtype=jnp.float32), (d_inner, 1))),
        "D": jnp.ones((d_inner,), jnp.float32),
        "out_proj_w": jax.random.normal(ks[6], (d_model, d_inner), jnp.float32) * s,
    }
    x = jax.random.normal(ks[7], (Bsz, L, d_model), jnp.float32)

    out = mamba_block_pallas(x, params, d_conv=d_conv)
    out = jax.block_until_ready(out)

    ref = mamba_block_ref(x, params, d_conv=d_conv)
    assert out.shape == (Bsz, L, d_model)
    assert bool(jnp.all(jnp.isfinite(out)))
    err = float(jnp.max(jnp.abs(out - ref)))
    if err < 3e-2:   # bf16 MXU vs f32 reference
        print("KERNEL_OK")
    else:
        print(f"MISMATCH max_abs_err={err}")
</pallas_src>

<mosaic_0001>
module attributes {stable_mosaic.version = 11 : i64} {
  func.func @_mamba_block_kernel(%arg0: i32, %arg1: memref<1x8x2x32xf32, #tpu.memory_space<vmem>>, %arg2: memref<32x128xbf16, #tpu.memory_space<vmem>>, %arg3: memref<4x64xf32, #tpu.memory_space<vmem>>, %arg4: memref<1x64xf32, #tpu.memory_space<vmem>>, %arg5: memref<64x34xbf16, #tpu.memory_space<vmem>>, %arg6: memref<2x64xbf16, #tpu.memory_space<vmem>>, %arg7: memref<1x64xf32, #tpu.memory_space<vmem>>, %arg8: memref<16x64xf32, #tpu.memory_space<vmem>>, %arg9: memref<1x64xf32, #tpu.memory_space<vmem>>, %arg10: memref<64x32xbf16, #tpu.memory_space<vmem>>, %arg11: memref<1x8x2x32xf32, #tpu.memory_space<vmem>>) attributes {dimension_semantics = [#tpu.dimension_semantics<parallel>], iteration_bounds = array<i64: 2>, scalar_prefetch = 0 : i64, scratch_operands = 0 : i64, tpu.core_type = #tpu.core_type<tc>, window_params = [{transform_indices = @transform_0, window_bounds = array<i64: 1, 8, 2, 32>}, {pipeline_mode = #tpu.pipeline_mode<synchronous>, transform_indices = @transform_1, window_bounds = array<i64: 32, 128>}, {pipeline_mode = #tpu.pipeline_mode<synchronous>, transform_indices = @transform_2, window_bounds = array<i64: 4, 64>}, {pipeline_mode = #tpu.pipeline_mode<synchronous>, transform_indices = @transform_3, window_bounds = array<i64: 1, 64>}, {pipeline_mode = #tpu.pipeline_mode<synchronous>, transform_indices = @transform_4, window_bounds = array<i64: 64, 34>}, {pipeline_mode = #tpu.pipeline_mode<synchronous>, transform_indices = @transform_5, window_bounds = array<i64: 2, 64>}, {pipeline_mode = #tpu.pipeline_mode<synchronous>, transform_indices = @transform_6, window_bounds = array<i64: 1, 64>}, {pipeline_mode = #tpu.pipeline_mode<synchronous>, transform_indices = @transform_7, window_bounds = array<i64: 16, 64>}, {pipeline_mode = #tpu.pipeline_mode<synchronous>, transform_indices = @transform_8, window_bounds = array<i64: 1, 64>}, {pipeline_mode = #tpu.pipeline_mode<synchronous>, transform_indices = @transform_9, window_bounds = array<i64: 64, 32>}, {transform_indices = @transform_10, window_bounds = array<i64: 1, 8, 2, 32>}]} {
    %c0 = arith.constant 0 : index
    %c0_0 = arith.constant 0 : index
    %c0_1 = arith.constant 0 : index
    %c0_2 = arith.constant 0 : index
    %0 = vector.load %arg1[%c0, %c0_0, %c0_1, %c0_2] : memref<1x8x2x32xf32, #tpu.memory_space<vmem>>, vector<1x8x2x32xf32>
    %1 = vector.shape_cast %0 : vector<1x8x2x32xf32> to vector<16x32xf32>
    %2 = arith.truncf %1 : vector<16x32xf32> to vector<16x32xbf16>
    %c0_3 = arith.constant 0 : index
    %c0_4 = arith.constant 0 : index
    %3 = vector.load %arg2[%c0_3, %c0_4] : memref<32x128xbf16, #tpu.memory_space<vmem>>, vector<32x128xbf16>
    %cst = arith.constant dense<0.000000e+00> : vector<16x128xf32>
    %4 = tpu.matmul %2, %3, %cst {dimension_numbers = #tpu.dot_dimension_numbers<[1], [0], [0], [1], [0, 0, 1, 1], [], []>} : vector<16x32xbf16>, vector<32x128xbf16>, vector<16x128xf32> -> vector<16x128xf32>
    %5 = vector.extract_strided_slice %4 {offsets = [0, 0], sizes = [16, 64], strides = [1, 1]} : vector<16x128xf32> to vector<16x64xf32>
    %6 = vector.extract_strided_slice %4 {offsets = [0, 64], sizes = [16, 64], strides = [1, 1]} : vector<16x128xf32> to vector<16x64xf32>
    %cst_5 = arith.constant 0.000000e+00 : f32
    %7 = vector.broadcast %cst_5 : f32 to vector<6x64xf32>
    %8 = tpu.concatenate %7, %5 in 0 : vector<6x64xf32>, vector<16x64xf32> -> vector<22x64xf32>
    %c0_6 = arith.constant 0 : index
    %c0_7 = arith.constant 0 : index
    %9 = vector.load %arg3[%c0_6, %c0_7] : memref<4x64xf32, #tpu.memory_space<vmem>>, vector<4x64xf32>
    %10 = vector.extract_strided_slice %9 {offsets = [3, 0], sizes = [1, 64], strides = [1, 1]} : vector<4x64xf32> to vector<1x64xf32>
    %11 = vector.broadcast %10 : vector<1x64xf32> to vector<16x64xf32>
    %12 = arith.mulf %5, %11 : vector<16x64xf32>
    %13 = vector.extract_strided_slice %8 {offsets = [0, 0], sizes = [16, 64], strides = [1, 1]} : vector<22x64xf32> to vector<16x64xf32>
    %14 = vector.extract_strided_slice %9 {offsets = [0, 0], sizes = [1, 64], strides = [1, 1]} : vector<4x64xf32> to vector<1x64xf32>
    %15 = vector.broadcast %14 : vector<1x64xf32> to vector<16x64xf32>
    %16 = arith.mulf %13, %15 : vector<16x64xf32>
    %17 = arith.addf %12, %16 : vector<16x64xf32>
    %18 = vector.extract_strided_slice %8 {offsets = [2, 0], sizes = [16, 64], strides = [1, 1]} : vector<22x64xf32> to vector<16x64xf32>
    %19 = vector.extract_strided_slice %9 {offsets = [1, 0], sizes = [1, 64], strides = [1, 1]} : vector<4x64xf32> to vector<1x64xf32>
    %20 = vector.broadcast %19 : vector<1x64xf32> to vector<16x64xf32>
    %21 = arith.mulf %18, %20 : vector<16x64xf32>
    %22 = arith.addf %17, %21 : vector<16x64xf32>
    %23 = vector.extract_strided_slice %8 {offsets = [4, 0], sizes = [16, 64], strides = [1, 1]} : vector<22x64xf32> to vector<16x64xf32>
    %24 = vector.extract_strided_slice %9 {offsets = [2, 0], sizes = [1, 64], strides = [1, 1]} : vector<4x64xf32> to vector<1x64xf32>
    %25 = vector.broadcast %24 : vector<1x64xf32> to vector<16x64xf32>
    %26 = arith.mulf %23, %25 : vector<16x64xf32>
    %27 = arith.addf %22, %26 : vector<16x64xf32>
    %c0_8 = arith.constant 0 : index
    %c0_9 = arith.constant 0 : index
    %28 = vector.load %arg4[%c0_8, %c0_9] : memref<1x64xf32, #tpu.memory_space<vmem>>, vector<1x64xf32>
    %29 = vector.broadcast %28 : vector<1x64xf32> to vector<16x64xf32>
    %30 = arith.addf %27, %29 : vector<16x64xf32>
    %cst_10 = arith.constant 0.000000e+00 : f32
    %31 = vector.broadcast %cst_10 : f32 to vector<16x64xf32>
    %32 = arith.subf %31, %30 : vector<16x64xf32>
    %33 = math.exp %32 : vector<16x64xf32>
    %cst_11 = arith.constant 1.000000e+00 : f32
    %34 = vector.broadcast %cst_11 : f32 to vector<16x64xf32>
    %35 = arith.addf %34, %33 : vector<16x64xf32>
    %cst_12 = arith.constant 1.000000e+00 : f32
    %36 = vector.broadcast %cst_12 : f32 to vector<16x64xf32>
    %37 = arith.divf %36, %35 : vector<16x64xf32>
    %38 = arith.mulf %30, %37 : vector<16x64xf32>
    %39 = arith.truncf %38 : vector<16x64xf32> to vector<16x64xbf16>
    %c0_13 = arith.constant 0 : index
    %c0_14 = arith.constant 0 : index
    %40 = vector.load %arg5[%c0_13, %c0_14] : memref<64x34xbf16, #tpu.memory_space<vmem>>, vector<64x34xbf16>
    %cst_15 = arith.constant dense<0.000000e+00> : vector<16x34xf32>
    %41 = tpu.matmul %39, %40, %cst_15 {dimension_numbers = #tpu.dot_dimension_numbers<[1], [0], [0], [1], [0, 0, 1, 1], [], []>} : vector<16x64xbf16>, vector<64x34xbf16>, vector<16x34xf32> -> vector<16x34xf32>
    %42 = vector.extract_strided_slice %41 {offsets = [0, 0], sizes = [16, 2], strides = [1, 1]} : vector<16x34xf32> to vector<16x2xf32>
    %43 = vector.extract_strided_slice %41 {offsets = [0, 2], sizes = [16, 16], strides = [1, 1]} : vector<16x34xf32> to vector<16x16xf32>
    %44 = vector.extract_strided_slice %41 {offsets = [0, 18], sizes = [16, 16], strides = [1, 1]} : vector<16x34xf32> to vector<16x16xf32>
    %45 = arith.truncf %42 : vector<16x2xf32> to vector<16x2xbf16>
    %c0_16 = arith.constant 0 : index
    %c0_17 = arith.constant 0 : index
    %46 = vector.load %arg6[%c0_16, %c0_17] : memref<2x64xbf16, #tpu.memory_space<vmem>>, vector<2x64xbf16>
    %cst_18 = arith.constant dense<0.000000e+00> : vector<16x64xf32>
    %47 = tpu.matmul %45, %46, %cst_18 {dimension_numbers = #tpu.dot_dimension_numbers<[1], [0], [0], [1], [0, 0, 1, 1], [], []>} : vector<16x2xbf16>, vector<2x64xbf16>, vector<16x64xf32> -> vector<16x64xf32>
    %c0_19 = arith.constant 0 : index
    %c0_20 = arith.constant 0 : index
    %48 = vector.load %arg7[%c0_19, %c0_20] : memref<1x64xf32, #tpu.memory_space<vmem>>, vector<1x64xf32>
    %49 = vector.broadcast %48 : vector<1x64xf32> to vector<16x64xf32>
    %50 = arith.addf %47, %49 : vector<16x64xf32>
    %cst_21 = arith.constant 0.000000e+00 : f32
    %51 = vector.broadcast %cst_21 : f32 to vector<16x64xf32>
    %52 = arith.maximumf %50, %51 : vector<16x64xf32>
    %53 = math.absf %50 : vector<16x64xf32>
    %cst_22 = arith.constant 0.000000e+00 : f32
    %54 = vector.broadcast %cst_22 : f32 to vector<16x64xf32>
    %55 = arith.subf %54, %53 : vector<16x64xf32>
    %56 = math.exp %55 : vector<16x64xf32>
    %57 = math.log1p %56 : vector<16x64xf32>
    %58 = arith.addf %52, %57 : vector<16x64xf32>
    %59 = arith.mulf %58, %38 : vector<16x64xf32>
    %c0_23 = arith.constant 0 : index
    %c0_24 = arith.constant 0 : index
    %60 = vector.load %arg8[%c0_23, %c0_24] : memref<16x64xf32, #tpu.memory_space<vmem>>, vector<16x64xf32>
    %61 = math.exp %60 : vector<16x64xf32>
    %cst_25 = arith.constant 0.000000e+00 : f32
    %62 = vector.broadcast %cst_25 : f32 to vector<16x64xf32>
    %63 = arith.subf %62, %61 : vector<16x64xf32>
    %64 = vector.shape_cast %58 : vector<16x64xf32> to vector<16x1x64xf32>
    %65 = vector.shape_cast %63 : vector<16x64xf32> to vector<1x16x64xf32>
    %66 = vector.broadcast %64 : vector<16x1x64xf32> to vector<16x16x64xf32>
    %67 = vector.broadcast %65 : vector<1x16x64xf32> to vector<16x16x64xf32>
    %68 = arith.mulf %66, %67 : vector<16x16x64xf32>
    %69 = math.exp %68 : vector<16x16x64xf32>
    %70 = vector.shape_cast %43 : vector<16x16xf32> to vector<16x16x1xf32>
    %71 = vector.shape_cast %59 : vector<16x64xf32> to vector<16x1x64xf32>
    %72 = vector.broadcast %70 : vector<16x16x1xf32> to vector<16x16x64xf32>
    %73 = vector.broadcast %71 : vector<16x1x64xf32> to vector<16x16x64xf32>
    %74 = arith.mulf %72, %73 : vector<16x16x64xf32>
    %cst_26 = arith.constant 0.000000e+00 : f32
    %75 = vector.broadcast %cst_26 : f32 to vector<2x16x64xf32>
    %76 = vector.extract_strided_slice %69 {offsets = [0, 0, 0], sizes = [2, 16, 64], strides = [1, 1, 1]} : vector<16x16x64xf32> to vector<2x16x64xf32>
    %77 = arith.mulf %76, %75 : vector<2x16x64xf32>
    %78 = vector.extract_strided_slice %74 {offsets = [0, 0, 0], sizes = [2, 16, 64], strides = [1, 1, 1]} : vector<16x16x64xf32> to vector<2x16x64xf32>
    %79 = arith.addf %77, %78 : vector<2x16x64xf32>
    %80 = vector.extract_strided_slice %44 {offsets = [0, 0], sizes = [2, 16], strides = [1, 1]} : vector<16x16xf32> to vector<2x16xf32>
    %81 = vector.shape_cast %80 : vector<2x16xf32> to vector<2x16x1xf32>
    %82 = vector.broadcast %81 : vector<2x16x1xf32> to vector<2x16x64xf32>
    %83 = arith.mulf %82, %79 : vector<2x16x64xf32>
    %cst_27 = arith.constant dense<0.000000e+00> : vector<2x64xf32>
    %84 = vector.multi_reduction <add>, %83, %cst_27 [1] : vector<2x16x64xf32> to vector<2x64xf32>
    %85 = vector.extract_strided_slice %69 {offsets = [2, 0, 0], sizes = [2, 16, 64], strides = [1, 1, 1]} : vector<16x16x64xf32> to vector<2x16x64xf32>
    %86 = arith.mulf %85, %79 : vector<2x16x64xf32>
    %87 = vector.extract_strided_slice %74 {offsets = [2, 0, 0], sizes = [2, 16, 64], strides = [1, 1, 1]} : vector<16x16x64xf32> to vector<2x16x64xf32>
    %88 = arith.addf %86, %87 : vector<2x16x64xf32>
    %89 = vector.extract_strided_slice %44 {offsets = [2, 0], sizes = [2, 16], strides = [1, 1]} : vector<16x16xf32> to vector<2x16xf32>
    %90 = vector.shape_cast %89 : vector<2x16xf32> to vector<2x16x1xf32>
    %91 = vector.broadcast %90 : vector<2x16x1xf32> to vector<2x16x64xf32>
    %92 = arith.mulf %91, %88 : vector<2x16x64xf32>
    %cst_28 = arith.constant dense<0.000000e+00> : vector<2x64xf32>
    %93 = vector.multi_reduction <add>, %92, %cst_28 [1] : vector<2x16x64xf32> to vector<2x64xf32>
    %94 = vector.extract_strided_slice %69 {offsets = [4, 0, 0], sizes = [2, 16, 64], strides = [1, 1, 1]} : vector<16x16x64xf32> to vector<2x16x64xf32>
    %95 = arith.mulf %94, %88 : vector<2x16x64xf32>
    %96 = vector.extract_strided_slice %74 {offsets = [4, 0, 0], sizes = [2, 16, 64], strides = [1, 1, 1]} : vector<16x16x64xf32> to vector<2x16x64xf32>
    %97 = arith.addf %95, %96 : vector<2x16x64xf32>
    %98 = vector.extract_strided_slice %44 {offsets = [4, 0], sizes = [2, 16], strides = [1, 1]} : vector<16x16xf32> to vector<2x16xf32>
    %99 = vector.shape_cast %98 : vector<2x16xf32> to vector<2x16x1xf32>
    %100 = vector.broadcast %99 : vector<2x16x1xf32> to vector<2x16x64xf32>
    %101 = arith.mulf %100, %97 : vector<2x16x64xf32>
    %cst_29 = arith.constant dense<0.000000e+00> : vector<2x64xf32>
    %102 = vector.multi_reduction <add>, %101, %cst_29 [1] : vector<2x16x64xf32> to vector<2x64xf32>
    %103 = vector.extract_strided_slice %69 {offsets = [6, 0, 0], sizes = [2, 16, 64], strides = [1, 1, 1]} : vector<16x16x64xf32> to vector<2x16x64xf32>
    %104 = arith.mulf %103, %97 : vector<2x16x64xf32>
    %105 = vector.extract_strided_slice %74 {offsets = [6, 0, 0], sizes = [2, 16, 64], strides = [1, 1, 1]} : vector<16x16x64xf32> to vector<2x16x64xf32>
    %106 = arith.addf %104, %105 : vector<2x16x64xf32>
    %107 = vector.extract_strided_slice %44 {offsets = [6, 0], sizes = [2, 16], strides = [1, 1]} : vector<16x16xf32> to vector<2x16xf32>
    %108 = vector.shape_cast %107 : vector<2x16xf32> to vector<2x16x1xf32>
    %109 = vector.broadcast %108 : vector<2x16x1xf32> to vector<2x16x64xf32>
    %110 = arith.mulf %109, %106 : vector<2x16x64xf32>
    %cst_30 = arith.constant dense<0.000000e+00> : vector<2x64xf32>
    %111 = vector.multi_reduction <add>, %110, %cst_30 [1] : vector<2x16x64xf32> to vector<2x64xf32>
    %112 = vector.extract_strided_slice %69 {offsets = [8, 0, 0], sizes = [2, 16, 64], strides = [1, 1, 1]} : vector<16x16x64xf32> to vector<2x16x64xf32>
    %113 = arith.mulf %112, %106 : vector<2x16x64xf32>
    %114 = vector.extract_strided_slice %74 {offsets = [8, 0, 0], sizes = [2, 16, 64], strides = [1, 1, 1]} : vector<16x16x64xf32> to vector<2x16x64xf32>
    %115 = arith.addf %113, %114 : vector<2x16x64xf32>
    %116 = vector.extract_strided_slice %44 {offsets = [8, 0], sizes = [2, 16], strides = [1, 1]} : vector<16x16xf32> to vector<2x16xf32>
    %117 = vector.shape_cast %116 : vector<2x16xf32> to vector<2x16x1xf32>
    %118 = vector.broadcast %117 : vector<2x16x1xf32> to vector<2x16x64xf32>
    %119 = arith.mulf %118, %115 : vector<2x16x64xf32>
    %cst_31 = arith.constant dense<0.000000e+00> : vector<2x64xf32>
    %120 = vector.multi_reduction <add>, %119, %cst_31 [1] : vector<2x16x64xf32> to vector<2x64xf32>
    %121 = vector.extract_strided_slice %69 {offsets = [10, 0, 0], sizes = [2, 16, 64], strides = [1, 1, 1]} : vector<16x16x64xf32> to vector<2x16x64xf32>
    %122 = arith.mulf %121, %115 : vector<2x16x64xf32>
    %123 = vector.extract_strided_slice %74 {offsets = [10, 0, 0], sizes = [2, 16, 64], strides = [1, 1, 1]} : vector<16x16x64xf32> to vector<2x16x64xf32>
    %124 = arith.addf %122, %123 : vector<2x16x64xf32>
    %125 = vector.extract_strided_slice %44 {offsets = [10, 0], sizes = [2, 16], strides = [1, 1]} : vector<16x16xf32> to vector<2x16xf32>
    %126 = vector.shape_cast %125 : vector<2x16xf32> to vector<2x16x1xf32>
    %127 = vector.broadcast %126 : vector<2x16x1xf32> to vector<2x16x64xf32>
    %128 = arith.mulf %127, %124 : vector<2x16x64xf32>
    %cst_32 = arith.constant dense<0.000000e+00> : vector<2x64xf32>
    %129 = vector.multi_reduction <add>, %128, %cst_32 [1] : vector<2x16x64xf32> to vector<2x64xf32>
    %130 = vector.extract_strided_slice %69 {offsets = [12, 0, 0], sizes = [2, 16, 64], strides = [1, 1, 1]} : vector<16x16x64xf32> to vector<2x16x64xf32>
    %131 = arith.mulf %130, %124 : vector<2x16x64xf32>
    %132 = vector.extract_strided_slice %74 {offsets = [12, 0, 0], sizes = [2, 16, 64], strides = [1, 1, 1]} : vector<16x16x64xf32> to vector<2x16x64xf32>
    %133 = arith.addf %131, %132 : vector<2x16x64xf32>
    %134 = vector.extract_strided_slice %44 {offsets = [12, 0], sizes = [2, 16], strides = [1, 1]} : vector<16x16xf32> to vector<2x16xf32>
    %135 = vector.shape_cast %134 : vector<2x16xf32> to vector<2x16x1xf32>
    %136 = vector.broadcast %135 : vector<2x16x1xf32> to vector<2x16x64xf32>
    %137 = arith.mulf %136, %133 : vector<2x16x64xf32>
    %cst_33 = arith.constant dense<0.000000e+00> : vector<2x64xf32>
    %138 = vector.multi_reduction <add>, %137, %cst_33 [1] : vector<2x16x64xf32> to vector<2x64xf32>
    %139 = vector.extract_strided_slice %69 {offsets = [14, 0, 0], sizes = [2, 16, 64], strides = [1, 1, 1]} : vector<16x16x64xf32> to vector<2x16x64xf32>
    %140 = arith.mulf %139, %133 : vector<2x16x64xf32>
    %141 = vector.extract_strided_slice %74 {offsets = [14, 0, 0], sizes = [2, 16, 64], strides = [1, 1, 1]} : vector<16x16x64xf32> to vector<2x16x64xf32>
    %142 = arith.addf %140, %141 : vector<2x16x64xf32>
    %143 = vector.extract_strided_slice %44 {offsets = [14, 0], sizes = [2, 16], strides = [1, 1]} : vector<16x16xf32> to vector<2x16xf32>
    %144 = vector.shape_cast %143 : vector<2x16xf32> to vector<2x16x1xf32>
    %145 = vector.broadcast %144 : vector<2x16x1xf32> to vector<2x16x64xf32>
    %146 = arith.mulf %145, %142 : vector<2x16x64xf32>
    %cst_34 = arith.constant dense<0.000000e+00> : vector<2x64xf32>
    %147 = vector.multi_reduction <add>, %146, %cst_34 [1] : vector<2x16x64xf32> to vector<2x64xf32>
    %148 = tpu.concatenate %84, %93, %102, %111, %120, %129, %138, %147 in 0 : vector<2x64xf32>, vector<2x64xf32>, vector<2x64xf32>, vector<2x64xf32>, vector<2x64xf32>, vector<2x64xf32>, vector<2x64xf32>, vector<2x64xf32> -> vector<16x64xf32>
    %c0_35 = arith.constant 0 : index
    %c0_36 = arith.constant 0 : index
    %149 = vector.load %arg9[%c0_35, %c0_36] : memref<1x64xf32, #tpu.memory_space<vmem>>, vector<1x64xf32>
    %150 = vector.broadcast %149 : vector<1x64xf32> to vector<16x64xf32>
    %151 = arith.mulf %38, %150 : vector<16x64xf32>
    %152 = arith.addf %148, %151 : vector<16x64xf32>
    %cst_37 = arith.constant 0.000000e+00 : f32
    %153 = vector.broadcast %cst_37 : f32 to vector<16x64xf32>
    %154 = arith.subf %153, %6 : vector<16x64xf32>
    %155 = math.exp %154 : vector<16x64xf32>
    %cst_38 = arith.constant 1.000000e+00 : f32
    %156 = vector.broadcast %cst_38 : f32 to vector<16x64xf32>
    %157 = arith.addf %156, %155 : vector<16x64xf32>
    %cst_39 = arith.constant 1.000000e+00 : f32
    %158 = vector.broadcast %cst_39 : f32 to vector<16x64xf32>
    %159 = arith.divf %158, %157 : vector<16x64xf32>
    %160 = arith.mulf %6, %159 : vector<16x64xf32>
    %161 = arith.mulf %152, %160 : vector<16x64xf32>
    %162 = arith.truncf %161 : vector<16x64xf32> to vector<16x64xbf16>
    %c0_40 = arith.constant 0 : index
    %c0_41 = arith.constant 0 : index
    %163 = vector.load %arg10[%c0_40, %c0_41] : memref<64x32xbf16, #tpu.memory_space<vmem>>, vector<64x32xbf16>
    %cst_42 = arith.constant dense<0.000000e+00> : vector<16x32xf32>
    %164 = tpu.matmul %162, %163, %cst_42 {dimension_numbers = #tpu.dot_dimension_numbers<[1], [0], [0], [1], [0, 0, 1, 1], [], []>} : vector<16x64xbf16>, vector<64x32xbf16>, vector<16x32xf32> -> vector<16x32xf32>
    %165 = vector.shape_cast %164 : vector<16x32xf32> to vector<1x8x2x32xf32>
    %c0_43 = arith.constant 0 : index
    %c0_44 = arith.constant 0 : index
    %c0_45 = arith.constant 0 : index
    %c0_46 = arith.constant 0 : index
    %166 = vector.load %arg11[%c0_43, %c0_44, %c0_45, %c0_46] : memref<1x8x2x32xf32, #tpu.memory_space<vmem>>, vector<1x8x2x32xf32>
    tpu.vector_store %arg11[%c0_43, %c0_44, %c0_45, %c0_46], %165 {strides = array<i32>} : memref<1x8x2x32xf32, #tpu.memory_space<vmem>>, vector<1x8x2x32xf32>,
    return
  }
  func.func @transform_0(%arg0: i32) -> (i32, i32, i32, i32) {
    %c0_i32 = arith.constant 0 : i32
    %c0_i32_0 = arith.constant 0 : i32
    %c0_i32_1 = arith.constant 0 : i32
    %c0_i32_2 = arith.constant 0 : i32
    return %arg0, %c0_i32, %c0_i32_0, %c0_i32_1 : i32, i32, i32, i32
  }
  func.func @transform_1(%arg0: i32) -> (i32, i32) {
    %c0_i32 = arith.constant 0 : i32
    %c0_i32_0 = arith.constant 0 : i32
    %c0_i32_1 = arith.constant 0 : i32
    return %c0_i32, %c0_i32_0 : i32, i32
  }
  func.func @transform_2(%arg0: i32) -> (i32, i32) {
    %c0_i32 = arith.constant 0 : i32
    %c0_i32_0 = arith.constant 0 : i32
    %c0_i32_1 = arith.constant 0 : i32
    return %c0_i32, %c0_i32_0 : i32, i32
  }
  func.func @transform_3(%arg0: i32) -> (i32, i32) {
    %c0_i32 = arith.constant 0 : i32
    %c0_i32_0 = arith.constant 0 : i32
    %c0_i32_1 = arith.constant 0 : i32
    return %c0_i32, %c0_i32_0 : i32, i32
  }
  func.func @transform_4(%arg0: i32) -> (i32, i32) {
    %c0_i32 = arith.constant 0 : i32
    %c0_i32_0 = arith.constant 0 : i32
    %c0_i32_1 = arith.constant 0 : i32
    return %c0_i32, %c0_i32_0 : i32, i32
  }
  func.func @transform_5(%arg0: i32) -> (i32, i32) {
    %c0_i32 = arith.constant 0 : i32
    %c0_i32_0 = arith.constant 0 : i32
    %c0_i32_1 = arith.constant 0 : i32
    return %c0_i32, %c0_i32_0 : i32, i32
  }
  func.func @transform_6(%arg0: i32) -> (i32, i32) {
    %c0_i32 = arith.constant 0 : i32
    %c0_i32_0 = arith.constant 0 : i32
    %c0_i32_1 = arith.constant 0 : i32
    return %c0_i32, %c0_i32_0 : i32, i32
  }
  func.func @transform_7(%arg0: i32) -> (i32, i32) {
    %c0_i32 = arith.constant 0 : i32
    %c0_i32_0 = arith.constant 0 : i32
    %c0_i32_1 = arith.constant 0 : i32
    return %c0_i32, %c0_i32_0 : i32, i32
  }
  func.func @transform_8(%arg0: i32) -> (i32, i32) {
    %c0_i32 = arith.constant 0 : i32
    %c0_i32_0 = arith.constant 0 : i32
    %c0_i32_1 = arith.constant 0 : i32
    return %c0_i32, %c0_i32_0 : i32, i32
  }
  func.func @transform_9(%arg0: i32) -> (i32, i32) {
    %c0_i32 = arith.constant 0 : i32
    %c0_i32_0 = arith.constant 0 : i32
    %c0_i32_1 = arith.constant 0 : i32
    return %c0_i32, %c0_i32_0 : i32, i32
  }
  func.func @transform_10(%arg0: i32) -> (i32, i32, i32, i32) {
    %c0_i32 = arith.constant 0 : i32
    %c0_i32_0 = arith.constant 0 : i32
    %c0_i32_1 = arith.constant 0 : i32
    %c0_i32_2 = arith.constant 0 : i32
    return %arg0, %c0_i32, %c0_i32_0, %c0_i32_1 : i32, i32, i32, i32
  }
}

</mosaic_0001>

<llo_original>
// kernel: tpu_custom_call.1
$region0: #{tpu_custom_call.1}
  #allocation0 [shape = 'u32[]', space=smem, size = 0x4, offset = 0x4, fixed_abs, tag = 'smem constant byte address 0x4 - core index']
  #allocation1 [shape = 'u32[72,128]{1,0:T(1,128)}', space=vmem, size = 0x9000, scoped, tag = 'internal scratch']
  %s0 = inlined_call_operand.vmem [shape: f32[2,8,2,32], index: 0, kind: input, shape index: {}]
  %s1 = inlined_call_operand.vmem [shape: bf16[32,128], index: 1, kind: input, shape index: {}]
  %s2 = inlined_call_operand.vmem [shape: f32[4,64], index: 2, kind: input, shape index: {}]
  %s3 = inlined_call_operand.vmem [shape: f32[1,64], index: 3, kind: input, shape index: {}]
  %s4 = inlined_call_operand.vmem [shape: bf16[64,34], index: 4, kind: input, shape index: {}]
  %s5 = inlined_call_operand.vmem [shape: bf16[2,64], index: 5, kind: input, shape index: {}]
  %s6 = inlined_call_operand.vmem [shape: f32[1,64], index: 6, kind: input, shape index: {}]
  %s7 = inlined_call_operand.vmem [shape: f32[16,64], index: 7, kind: input, shape index: {}]
  %s8 = inlined_call_operand.vmem [shape: f32[1,64], index: 8, kind: input, shape index: {}]
  %s9 = inlined_call_operand.vmem [shape: bf16[64,32], index: 9, kind: input, shape index: {}]
  %s10 = inlined_call_operand.hbm [shape: f32[2,8,2,32], index: 10, kind: output, shape index: {}]
  %s11 = sld [smem:[#allocation0]]
  $region73: #{tpu_custom_call.1} parent=0
    _
  %s13 = ssub.s32 1, %s11
  %s14 = scalar_select 0, %s13, %s11
  $region1: #{tpu_custom_call.1} parent=0
    #allocation2 [shape = 'u8[16384]{0}', space=vmem, size = 0x4000, scoped, tag = 'output window, operand 0']
    #allocation3 [shape = 's32[2]{0}', space=sflag, size = 0x8, scoped, tag = 'scoped memory for tpu_custom_call.1']
    %15 = vsyncpa [#allocation3], 0
    %s16 = scalar_lea.sflag [#allocation3], 1
    %17 = vsyncpa %s16, 0
    loop: start=0, step=1, limit=4
    $region2: #{tpu_custom_call.1} parent=1 // loop_pre_header
      _
    $region3: #{tpu_custom_call.1} parent=1 // loop_header
      %s19 = sphi 0, %s23
      %p20 = scmp.ge.s32.totalorder %s19, 4
      %s29 = sphi 0, %s31
      %s32 = sphi 0, %s29
      %s33 = sphi 0, %s32
      %s49 = sphi 0, %s33
      %s53 = sphi 0, %s53
      %s55 = sphi 0, %s53
      %s56 = sphi 0, %s55
      %s70 = sphi 0, %s56
      %s74 = sphi 0, %s74
      %s76 = sphi 0, %s74
      %s77 = sphi 0, %s76
      %s91 = sphi 0, %s77
      %s95 = sphi 0, %s95
      %s97 = sphi 0, %s95
      %s98 = sphi 0, %s97
      %s112 = sphi 0, %s98
      %s116 = sphi 0, %s116
      %s118 = sphi 0, %s116
      %s119 = sphi 0, %s118
      %s133 = sphi 0, %s119
      %s137 = sphi 0, %s137
      %s139 = sphi 0, %s137
      %s140 = sphi 0, %s139
      %s154 = sphi 0, %s140
      %s158 = sphi 0, %s158
      %s160 = sphi 0, %s158
      %s161 = sphi 0, %s160
      %s175 = sphi 0, %s161
      %s179 = sphi 0, %s179
      %s181 = sphi 0, %s179
      %s182 = sphi 0, %s181
      %s196 = sphi 0, %s182
      %s200 = sphi 0, %s200
      %s202 = sphi 0, %s200
      %s203 = sphi 0, %s202
      %s217 = sphi 0, %s203
      %s221 = sphi 0, %s221
      %s223 = sphi 0, %s221
      %s224 = sphi 0, %s223
      %s238 = sphi 0, %s224
      %s244 = sphi 0, %s246
      %s247 = sphi 0, %s244
      %s248 = sphi 0, %s247
      %s264 = sphi 0, %s248
    $region4: #{tpu_custom_call.1} parent=1 // loop_header_branch
      %22 = sbr.rel (%p20) target = $region8
    $region5: #{tpu_custom_call.1} parent=1 // loop_body
      %s24 = ssub.s32 %s19, 1
      %s25 = ssub.s32 %s19, 2
      %s26 = sadd.s32 %s19, 1
      %s27 = ssub.s32 %s19, %s26
      %p28 = scmp.eq.s32.totalorder %s27, 0
      %s30 = sadd.s32 %s29, 1
      %s31 = scalar_select %p28, %s29, %s30
      %p34 = pneg %p28
      %p35 = scmp.eq.s32.totalorder %s19, 1
      %p36 = por %p34, %p35
      %p37 = scmp.ne.s32.totalorder %s29, %s32
      %p38 = scmp.eq.s32.totalorder %s19, 0
      %p39 = por %p37, %p38
      %p40 = scmp.ne.s32.totalorder %s29, %s32
      %p41 = scmp.eq.s32.totalorder %s24, 1
      %p42 = por %p40, %p41
      %p43 = scmp.ne.s32.totalorder %s32, %s33
      %p44 = scmp.eq.s32.totalorder %s24, 0
      %p45 = por %p43, %p44
      %p46 = scmp.ne.s32.totalorder %s32, %s33
      %p47 = scmp.eq.s32.totalorder %s25, 1
      %p48 = por %p46, %p47
      %p50 = scmp.ne.s32.totalorder %s33, %s49
      %p51 = scmp.eq.s32.totalorder %s25, 0
      %p52 = por %p50, %p51
      %s54 = sadd.s32 %s53, 1
      %p57 = scmp.eq.s32.totalorder %s19, 1
      %p58 = scmp.ne.s32.totalorder %s53, %s55
      %p59 = scmp.eq.s32.totalorder %s19, 0
      %p60 = por %p58, %p59
      %p61 = scmp.ne.s32.totalorder %s53, %s55
      %p62 = scmp.eq.s32.totalorder %s24, 1
      %p63 = por %p61, %p62
      %p64 = scmp.ne.s32.totalorder %s55, %s56
      %p65 = scmp.eq.s32.totalorder %s24, 0
      %p66 = por %p64, %p65
      %p67 = scmp.ne.s32.totalorder %s55, %s56
      %p68 = scmp.eq.s32.totalorder %s25, 1
      %p69 = por %p67, %p68
      %p71 = scmp.ne.s32.totalorder %s56, %s70
      %p72 = scmp.eq.s32.totalorder %s25, 0
      %p73 = por %p71, %p72
      %s75 = sadd.s32 %s74, 1
      %p78 = scmp.eq.s32.totalorder %s19, 1
      %p79 = scmp.ne.s32.totalorder %s74, %s76
      %p80 = scmp.eq.s32.totalorder %s19, 0
      %p81 = por %p79, %p80
      %p82 = scmp.ne.s32.totalorder %s74, %s76
      %p83 = scmp.eq.s32.totalorder %s24, 1
      %p84 = por %p82, %p83
      %p85 = scmp.ne.s32.totalorder %s76, %s77
      %p86 = scmp.eq.s32.totalorder %s24, 0
      %p87 = por %p85, %p86
      %p88 = scmp.ne.s32.totalorder %s76, %s77
      %p89 = scmp.eq.s32.totalorder %s25, 1
      %p90 = por %p88, %p89
      %p92 = scmp.ne.s32.totalorder %s77, %s91
      %p93 = scmp.eq.s32.totalorder %s25, 0
      %p94 = por %p92, %p93
      %s96 = sadd.s32 %s95, 1
      %p99 = scmp.eq.s32.totalorder %s19, 1
      %p100 = scmp.ne.s32.totalorder %s95, %s97
      %p101 = scmp.eq.s32.totalorder %s19, 0
      %p102 = por %p100, %p101
      %p103 = scmp.ne.s32.totalorder %s95, %s97
      %p104 = scmp.eq.s32.totalorder %s24, 1
      %p105 = por %p103, %p104
      %p106 = scmp.ne.s32.totalorder %s97, %s98
      %p107 = scmp.eq.s32.totalorder %s24, 0
      %p108 = por %p106, %p107
      %p109 = scmp.ne.s32.totalorder %s97, %s98
      %p110 = scmp.eq.s32.totalorder %s25, 1
      %p111 = por %p109, %p110
      %p113 = scmp.ne.s32.totalorder %s98, %s112
      %p114 = scmp.eq.s32.totalorder %s25, 0
      %p115 = por %p113, %p114
      %s117 = sadd.s32 %s116, 1
      %p120 = scmp.eq.s32.totalorder %s19, 1
      %p121 = scmp.ne.s32.totalorder %s116, %s118
      %p122 = scmp.eq.s32.totalorder %s19, 0
      %p123 = por %p121, %p122
      %p124 = scmp.ne.s32.totalorder %s116, %s118
      %p125 = scmp.eq.s32.totalorder %s24, 1
      %p126 = por %p124, %p125
      %p127 = scmp.ne.s32.totalorder %s118, %s119
      %p128 = scmp.eq.s32.totalorder %s24, 0
      %p129 = por %p127, %p128
      %p130 = scmp.ne.s32.totalorder %s118, %s119
      %p131 = scmp.eq.s32.totalorder %s25, 1
      %p132 = por %p130, %p131
      %p134 = scmp.ne.s32.totalorder %s119, %s133
      %p135 = scmp.eq.s32.totalorder %s25, 0
      %p136 = por %p134, %p135
      %s138 = sadd.s32 %s137, 1
      %p141 = scmp.eq.s32.totalorder %s19, 1
      %p142 = scmp.ne.s32.totalorder %s137, %s139
      %p143 = scmp.eq.s32.totalorder %s19, 0
      %p144 = por %p142, %p143
      %p145 = scmp.ne.s32.totalorder %s137, %s139
      %p146 = scmp.eq.s32.totalorder %s24, 1
      %p147 = por %p145, %p146
      %p148 = scmp.ne.s32.totalorder %s139, %s140
      %p149 = scmp.eq.s32.totalorder %s24, 0
      %p150 = por %p148, %p149
      %p151 = scmp.ne.s32.totalorder %s139, %s140
      %p152 = scmp.eq.s32.totalorder %s25, 1
      %p153 = por %p151, %p152
      %p155 = scmp.ne.s32.totalorder %s140, %s154
      %p156 = scmp.eq.s32.totalorder %s25, 0
      %p157 = por %p155, %p156
      %s159 = sadd.s32 %s158, 1
      %p162 = scmp.eq.s32.totalorder %s19, 1
      %p163 = scmp.ne.s32.totalorder %s158, %s160
      %p164 = scmp.eq.s32.totalorder %s19, 0
      %p165 = por %p163, %p164
      %p166 = scmp.ne.s32.totalorder %s158, %s160
      %p167 = scmp.eq.s32.totalorder %s24, 1
      %p168 = por %p166, %p167
      %p169 = scmp.ne.s32.totalorder %s160, %s161
      %p170 = scmp.eq.s32.totalorder %s24, 0
      %p171 = por %p169, %p170
      %p172 = scmp.ne.s32.totalorder %s160, %s161
      %p173 = scmp.eq.s32.totalorder %s25, 1
      %p174 = por %p172, %p173
      %p176 = scmp.ne.s32.totalorder %s161, %s175
      %p177 = scmp.eq.s32.totalorder %s25, 0
      %p178 = por %p176, %p177
      %s180 = sadd.s32 %s179, 1
      %p183 = scmp.eq.s32.totalorder %s19, 1
      %p184 = scmp.ne.s32.totalorder %s179, %s181
      %p185 = scmp.eq.s32.totalorder %s19, 0
      %p186 = por %p184, %p185
      %p187 = scmp.ne.s32.totalorder %s179, %s181
      %p188 = scmp.eq.s32.totalorder %s24, 1
      %p189 = por %p187, %p188
      %p190 = scmp.ne.s32.totalorder %s181, %s182
      %p191 = scmp.eq.s32.totalorder %s24, 0
      %p192 = por %p190, %p191
      %p193 = scmp.ne.s32.totalorder %s181, %s182
      %p194 = scmp.eq.s32.totalorder %s25, 1
      %p195 = por %p193, %p194
      %p197 = scmp.ne.s32.totalorder %s182, %s196
      %p198 = scmp.eq.s32.totalorder %s25, 0
      %p199 = por %p197, %p198
      %s201 = sadd.s32 %s200, 1
      %p204 = scmp.eq.s32.totalorder %s19, 1
      %p205 = scmp.ne.s32.totalorder %s200, %s202
      %p206 = scmp.eq.s32.totalorder %s19, 0
      %p207 = por %p205, %p206
      %p208 = scmp.ne.s32.totalorder %s200, %s202
      %p209 = scmp.eq.s32.totalorder %s24, 1
      %p210 = por %p208, %p209
      %p211 = scmp.ne.s32.totalorder %s202, %s203
      %p212 = scmp.eq.s32.totalorder %s24, 0
      %p213 = por %p211, %p212
      %p214 = scmp.ne.s32.totalorder %s202, %s203
      %p215 = scmp.eq.s32.totalorder %s25, 1
      %p216 = por %p214, %p215
      %p218 = scmp.ne.s32.totalorder %s203, %s217
      %p219 = scmp.eq.s32.totalorder %s25, 0
      %p220 = por %p218, %p219
      %s222 = sadd.s32 %s221, 1
      %p225 = scmp.eq.s32.totalorder %s19, 1
      %p226 = scmp.ne.s32.totalorder %s221, %s223
      %p227 = scmp.eq.s32.totalorder %s19, 0
      %p228 = por %p226, %p227
      %p229 = scmp.ne.s32.totalorder %s221, %s223
      %p230 = scmp.eq.s32.totalorder %s24, 1
      %p231 = por %p229, %p230
      %p232 = scmp.ne.s32.totalorder %s223, %s224
      %p233 = scmp.eq.s32.totalorder %s24, 0
      %p234 = por %p232, %p233
      %p235 = scmp.ne.s32.totalorder %s223, %s224
      %p236 = scmp.eq.s32.totalorder %s25, 1
      %p237 = por %p235, %p236
      %p239 = scmp.ne.s32.totalorder %s224, %s238
      %p240 = scmp.eq.s32.totalorder %s25, 0
      %p241 = por %p239, %p240
      %s242 = ssub.s32 %s19, %s26
      %p243 = scmp.eq.s32.totalorder %s242, 0
      %s245 = sadd.s32 %s244, 1
      %s246 = scalar_select %p243, %s244, %s245
      %p249 = pneg %p243
      %p250 = scmp.eq.s32.totalorder %s19, 1
      %p251 = por %p249, %p250
      %p252 = scmp.ne.s32.totalorder %s244, %s247
      %p253 = scmp.eq.s32.totalorder %s19, 0
      %p254 = por %p252, %p253
      %p255 = scmp.ne.s32.totalorder %s244, %s247
      %p256 = scmp.eq.s32.totalorder %s24, 1
      %p257 = por %p255, %p256
      %p258 = scmp.ne.s32.totalorder %s247, %s248
      %p259 = scmp.eq.s32.totalorder %s24, 0
      %p260 = por %p258, %p259
      %p261 = scmp.ne.s32.totalorder %s247, %s248
      %p262 = scmp.eq.s32.totalorder %s25, 1
      %p263 = por %p261, %p262
      %p265 = scmp.ne.s32.totalorder %s248, %s264
      %p266 = scmp.eq.s32.totalorder %s25, 0
      %p267 = por %p265, %p266
      %p268 = scmp.le.s32.totalorder 1, %s19
      %p269 = scmp.lt.s32.totalorder %s19, 3
      %p270 = pnand %p268, %p269
      %p271 = pneg %p270
      // Predicated region
      $region9: #{tpu_custom_call.1} parent=5 // pred_check
        _
      $region10: #{tpu_custom_call.1} parent=5 // pred_check_branch
        %273 = sbr.rel (%p270) target = $region12
      $region11: #{tpu_custom_call.1} parent=5 // pred_region
        %s274 = ssub.s32 %s19, 1
        // Predicated region
        $region13: #{tpu_custom_call.1} parent=11 // pred_check
          %p275 = pneg %p66
        $region14: #{tpu_custom_call.1} parent=11 // pred_check_branch
          %277 = sbr.rel (%p275) target = $region16
        $region15: #{tpu_custom_call.1} parent=11 // pred_region
          _
        $region16: #{tpu_custom_call.1} parent=11 // pred_fallthru
          _
        // Predicated region
        $region17: #{tpu_custom_call.1} parent=11 // pred_check
          %p278 = pneg %p87
        $region18: #{tpu_custom_call.1} parent=11 // pred_check_branch
          %280 = sbr.rel (%p278) target = $region20
        $region19: #{tpu_custom_call.1} parent=11 // pred_region
          _
        $region20: #{tpu_custom_call.1} parent=11 // pred_fallthru
          _
        // Predicated region
        $region21: #{tpu_custom_call.1} parent=11 // pred_check
          %p281 = pneg %p108
        $region22: #{tpu_custom_call.1} parent=11 // pred_check_branch
          %283 = sbr.rel (%p281) target = $region24
        $region23: #{tpu_custom_call.1} parent=11 // pred_region
          _
        $region24: #{tpu_custom_call.1} parent=11 // pred_fallthru
          _
        // Predicated region
        $region25: #{tpu_custom_call.1} parent=11 // pred_check
          %p284 = pneg %p129
        $region26: #{tpu_custom_call.1} parent=11 // pred_check_branch
          %286 = sbr.rel (%p284) target = $region28
        $region27: #{tpu_custom_call.1} parent=11 // pred_region
          _
        $region28: #{tpu_custom_call.1} parent=11 // pred_fallthru
          _
        // Predicated region
        $region29: #{tpu_custom_call.1} parent=11 // pred_check
          %p287 = pneg %p150
        $region30: #{tpu_custom_call.1} parent=11 // pred_check_branch
          %289 = sbr.rel (%p287) target = $region32
        $region31: #{tpu_custom_call.1} parent=11 // pred_region
          _
        $region32: #{tpu_custom_call.1} parent=11 // pred_fallthru
          _
        // Predicated region
        $region33: #{tpu_custom_call.1} parent=11 // pred_check
          %p290 = pneg %p171
        $region34: #{tpu_custom_call.1} parent=11 // pred_check_branch
          %292 = sbr.rel (%p290) target = $region36
        $region35: #{tpu_custom_call.1} parent=11 // pred_region
          _
        $region36: #{tpu_custom_call.1} parent=11 // pred_fallthru
          _
        // Predicated region
        $region37: #{tpu_custom_call.1} parent=11 // pred_check
          %p293 = pneg %p192
        $region38: #{tpu_custom_call.1} parent=11 // pred_check_branch
          %295 = sbr.rel (%p293) target = $region40
        $region39: #{tpu_custom_call.1} parent=11 // pred_region
          _
        $region40: #{tpu_custom_call.1} parent=11 // pred_fallthru
          _
        // Predicated region
        $region41: #{tpu_custom_call.1} parent=11 // pred_check
          %p296 = pneg %p213
        $region42: #{tpu_custom_call.1} parent=11 // pred_check_branch
          %298 = sbr.rel (%p296) target = $region44
        $region43: #{tpu_custom_call.1} parent=11 // pred_region
          _
        $region44: #{tpu_custom_call.1} parent=11 // pred_fallthru
          _
        // Predicated region
        $region45: #{tpu_custom_call.1} parent=11 // pred_check
          %p299 = pneg %p234
        $region46: #{tpu_custom_call.1} parent=11 // pred_check_branch
          %301 = sbr.rel (%p299) target = $region48
        $region47: #{tpu_custom_call.1} parent=11 // pred_region
          _
        $region48: #{tpu_custom_call.1} parent=11 // pred_fallthru
          _
      $region12: #{tpu_custom_call.1} parent=5 // pred_fallthru
        _
      %p302 = scmp.lt.s32.totalorder %s19, 2
      // Predicated region
      $region49: #{tpu_custom_call.1} parent=5 // pred_check
        %p303 = pneg %p302
      $region50: #{tpu_custom_call.1} parent=5 // pred_check_branch
        %305 = sbr.rel (%p303) target = $region52
      $region51: #{tpu_custom_call.1} parent=5 // pred_region
        // Predicated region
        $region53: #{tpu_custom_call.1} parent=51 // pred_check
          %p306 = pneg %p39
        $region54: #{tpu_custom_call.1} parent=51 // pred_check_branch
          %308 = sbr.rel (%p306) target = $region56
        $region55: #{tpu_custom_call.1} parent=51 // pred_region
          %p309 = scmp.lt.s32.totalorder %s19, 1
          %s310 = scalar_select %p309, %s19, 1
          %s311 = smul.addr %s310, 8
          %s312 = smul.addr %s311, 2
          %s313 = scalar_lea.vmem %s0, %s312
        $region56: #{tpu_custom_call.1} parent=51 // pred_fallthru
          _
      $region52: #{tpu_custom_call.1} parent=5 // pred_fallthru
        _
      %p314 = scmp.le.s32.totalorder 1, %s19
      %p315 = scmp.lt.s32.totalorder %s19, 3
      %p316 = pnand %p314, %p315
      %p317 = pneg %p316
      // Predicated region
      $region57: #{tpu_custom_call.1} parent=5 // pred_check
        _
      $region58: #{tpu_custom_call.1} parent=5 // pred_check_branch
        %319 = sbr.rel (%p316) target = $region60
      $region59: #{tpu_custom_call.1} parent=5 // pred_region
        %s320 = ssub.s32 %s19, 1
        %p321 = scmp.lt.s32.totalorder %s24, 1
        %s322 = scalar_select %p321, %s24, 1
        %s323 = smul.addr %s322, 8
        %s324 = smul.addr %s323, 2
        %s325 = scalar_lea.vmem %s0, %s324
        %p326 = pneg %p45
        %p327 = pneg %p42
        %p328 = pneg %p66
        %p329 = pneg %p63
        %p330 = pneg %p87
        %p331 = pneg %p84
        %p332 = pneg %p108
        %p333 = pneg %p105
        %p334 = pneg %p129
        %p335 = pneg %p126
        %p336 = pneg %p150
        %p337 = pneg %p147
        %p338 = pneg %p171
        %p339 = pneg %p168
        %p340 = pneg %p192
        %p341 = pneg %p189
        %p342 = pneg %p213
        %p343 = pneg %p210
        %p344 = pneg %p234
        %p345 = pneg %p231
        %p346 = pneg %p260
        %p347 = pneg %p257
        %s348 = sand.u32 %s247, 1
        %s349 = scalar_lea.sflag [#allocation3], %s348
        %s350 = sand.u32 %s247, 1
        %s351 = smul.addr %s350, 16
        %s352 = scalar_lea.vmem [#allocation2], %s351
        %p353 = scmp.lt.s32.totalorder %s24, 1
        %s354 = scalar_select %p353, %s24, 1
        %s355 = smul.addr %s354, 8
        %s356 = smul.addr %s355, 2
        %s357 = scalar_lea.vmem %s0, %s356
        %v359 = vld [vmem:[%s357] sm:$0x3]
        %v360 = vld [vmem:[%s357 + $0x2] sm:$0x3]
        %v361 = vld [vmem:[%s357 + $0x4] sm:$0x3]
        %v362 = vld [vmem:[%s357 + $0x6] sm:$0x3]
        %v363 = vld [vmem:[%s357 + $0x8] sm:$0x3]
        %v364 = vld [vmem:[%s357 + $0xa] sm:$0x3]
        %v365 = vld [vmem:[%s357 + $0xc] sm:$0x3]
        %v366 = vld [vmem:[%s357 + $0xe] sm:$0x3]
        %375 = vst [vmem:[#allocation1] ss:$4 sm:$0xff] %v359
        %s376 = scalar_lea.vmem [#allocation1], 1
        %377 = vst [vmem:[%s376] ss:$4 sm:$0xff] %v360
        %s378 = scalar_lea.vmem [#allocation1], 2
        %379 = vst [vmem:[%s378] ss:$4 sm:$0xff] %v361
        %s380 = scalar_lea.vmem [#allocation1], 3
        %381 = vst [vmem:[%s380] ss:$4 sm:$0xff] %v362
        %s382 = scalar_lea.vmem [#allocation1], 32
        %383 = vst [vmem:[%s382] ss:$4 sm:$0xff] %v363
        %s384 = scalar_lea.vmem [#allocation1], 33
        %385 = vst [vmem:[%s384] ss:$4 sm:$0xff] %v364
        %s386 = scalar_lea.vmem [#allocation1], 34
        %387 = vst [vmem:[%s386] ss:$4 sm:$0xff] %v365
        %s388 = scalar_lea.vmem [#allocation1], 35
        %389 = vst [vmem:[%s388] ss:$4 sm:$0xff] %v366
        %v390 = vld.sshfl [vmem:[#allocation1] sm:$0xff pattern:$0x73625140]
        %v391 = vld.sshfl [vmem:[#allocation1 + $0x20] sm:$0xff pattern:$0x73625140]
        %v394 = vpack.c.bf16 %v391, %v390
        %v395 = vld [vmem:[%s1] sm:$0xf]
        %v396 = vld [vmem:[%s1 + $0x4] sm:$0xf]
        %v397 = vld [vmem:[%s1 + $0x8] sm:$0xf]
        %v398 = vld [vmem:[%s1 + $0xc] sm:$0xf]
        %v403 = vunpack.c.l.b16 %v395
        %v404 = vunpack.c.l.b16 %v396
        %v405 = vunpack.c.l.b16 %v397
        %v406 = vunpack.c.l.b16 %v398
        %v407 = vpack.c.b16 %v404, %v403
        %v408 = vpack.c.b16 %v406, %v405
        %vm411 = vcmask 261120
        %v413 = vsel %vm411, %v394, 0
        %415 = vmatpush.bf16.msra.mxu0 0
        %416 = vmatpush.bf16.msra.mxu0 0
        %417 = vmatpush.bf16.msra.mxu0 0
        %418 = vmatpush.bf16.msra.mxu0 0
        %419 = vmatpush.bf16.msra.mxu0 0
        %420 = vmatpush.bf16.msra.mxu0 0
        %421 = vmatpush.bf16.msra.mxu0 %v408
        %422 = vmatpush.bf16.msra.mxu0 %v407
        %423 = vmatmul.bf16.gmra.mxu0 %v413
        %v424 = vpop.f32.mrf.mxu0
        %v425 = vadd.f32 0.0, %v424
        %v426 = vpop.f32.mrf.mxu0
        %v427 = vadd.f32 0.0, %v426
        %428 = vdwg.mxu0
        %vm431 = vcmask 1045504
        %v432 = vrot.slane %v425, 2
        %v433 = vrot.slane %v427, 2
        %v434 = vsel %vm431, %v432, %v433
        %v438 = vsel %vm431, 0.0, %v432
        %v439 = vld [vmem:[%s2] sm:$0xf]
        %v440 = vperm.slane %v439, 3
        %v441 = vmul.f32 %v425, %v440
        %v442 = vmul.f32 %v427, %v440
        %v443 = vperm.slane %v439, 0
        %v444 = vmul.f32 %v438, %v443
        %v445 = vmul.f32 %v434, %v443
        %v446 = vadd.f32 %v441, %v444
        %v447 = vadd.f32 %v442, %v445
        %v448 = vperm.slane %v439, 1
        %v449 = vmul.f32 %v438, %v448
        %v450 = vmul.f32 %v434, %v448
        %v451 = vmul.f32 %v433, %v448
        %v455 = vrot.slane %v449, 2
        %v456 = vrot.slane %v450, 2
        %v457 = vsel %vm431, %v455, %v456
        %v458 = vrot.slane %v451, 2
        %v459 = vsel %vm431, %v456, %v458
        %v462 = vadd.f32 %v446, %v457
        %v463 = vadd.f32 %v447, %v459
        %v464 = vperm.slane %v439, 2
        %v465 = vmul.f32 %v438, %v464
        %v466 = vmul.f32 %v434, %v464
        %v467 = vmul.f32 %v433, %v464
        %vm471 = vcmask 1043456
        %v472 = vrot.slane %v465, 4
        %v473 = vrot.slane %v466, 4
        %v474 = vsel %vm471, %v472, %v473
        %v475 = vrot.slane %v467, 4
        %v476 = vsel %vm471, %v473, %v475
        %v479 = vadd.f32 %v462, %v474
        %v480 = vadd.f32 %v463, %v476
        %v481 = vld [vmem:[%s3] sm:$0x1]
        %v483 = vperm.slane %v481, 0
        %v485 = vadd.f32 %v479, %v483
        %v486 = vadd.f32 %v480, %v483
        %v487 = vsub.f32 0.0, %v485
        %v488 = vsub.f32 0.0, %v486
        %v489 = vmul.f32 %v487, 1.442695
        %v490 = vpow.pop %v489
        %v491 = vmul.f32 %v488, 1.442695
        %v492 = vpow.pop %v491
        %v493 = vadd.f32 %v490, 1.0
        %v494 = vadd.f32 %v492, 1.0
        %v495 = vrcp.pop %v493
        %v496 = vmul.f32 %v493, %v495
        %v497 = vsub.f32 1.0, %v496
        %v498 = vmul.f32 %v495, %v497
        %v499 = vadd.f32 %v495, %v498
        %vm500 = vweird.f32 %v493
        %vm501 = vweird.f32 %v495
        %vm502 = vmor %vm500, %vm501
        %v503 = vsel %vm502, %v495, %v499
        %v504 = vand.u32 2147483647, %v493
        %vm505 = vcmp.eq.f32.partialorder %v504, 8.507059e+37
        %v506 = vand.u32 %v493, 2147483648
        %v507 = vor.u32 1.1754944e-38, %v506
        %v508 = vsel %vm505, %v507, %v503
        %v509 = vmul.f32 1.0, %v508
        %v510 = vrcp.pop %v494
        %v511 = vmul.f32 %v494, %v510
        %v512 = vsub.f32 1.0, %v511
        %v513 = vmul.f32 %v510, %v512
        %v514 = vadd.f32 %v510, %v513
        %vm515 = vweird.f32 %v494
        %vm516 = vweird.f32 %v510
        %vm517 = vmor %vm515, %vm516
        %v518 = vsel %vm517, %v510, %v514
        %v519 = vand.u32 2147483647, %v494
        %vm520 = vcmp.eq.f32.partialorder %v519, 8.507059e+37
        %v521 = vand.u32 %v494, 2147483648
        %v522 = vor.u32 1.1754944e-38, %v521
        %v523 = vsel %vm520, %v522, %v518
        %v524 = vmul.f32 1.0, %v523
        %v525 = vmul.f32 %v485, %v509
        %v526 = vmul.f32 %v486, %v524
        %v527 = vpack.c.bf16 %v526, %v525
        %v528 = vld [vmem:[%s4] sm:$0xf]
        %v529 = vld [vmem:[%s4 + $0x4] sm:$0xf]
        %v530 = vld [vmem:[%s4 + $0x8] sm:$0xf]
        %v531 = vld [vmem:[%s4 + $0xc] sm:$0xf]
        %v532 = vld [vmem:[%s4 + $0x10] sm:$0xf]
        %v533 = vld [vmem:[%s4 + $0x14] sm:$0xf]
        %v534 = vld [vmem:[%s4 + $0x18] sm:$0xf]
        %v535 = vld [vmem:[%s4 + $0x1c] sm:$0xf]
        %v544 = vunpack.c.l.b16 %v528
        %v545 = vunpack.c.l.b16 %v529
        %v546 = vunpack.c.l.b16 %v530
        %v547 = vunpack.c.l.b16 %v531
        %v548 = vunpack.c.l.b16 %v532
        %v549 = vunpack.c.l.b16 %v533
        %v550 = vunpack.c.l.b16 %v534
        %v551 = vunpack.c.l.b16 %v535
        %v552 = vpack.c.b16 %v545, %v544
        %v553 = vpack.c.b16 %v547, %v546
        %v554 = vpack.c.b16 %v549, %v548
        %v555 = vpack.c.b16 %v551, %v550
        %vm560 = vcmask 523264
        %v562 = vsel %vm560, %v527, 0
        %564 = vmatpush.bf16.msra.mxu0 0
        %565 = vmatpush.bf16.msra.mxu0 0
        %566 = vmatpush.bf16.msra.mxu0 0
        %567 = vmatpush.bf16.msra.mxu0 0
        %568 = vmatpush.bf16.msra.mxu0 %v555
        %569 = vmatpush.bf16.msra.mxu0 %v554
        %570 = vmatpush.bf16.msra.mxu0 %v553
        %571 = vmatpush.bf16.msra.mxu0 %v552
        %572 = vmatmul.bf16.gmra.mxu0 %v562
        %v573 = vpop.f32.mrf.mxu0
        %v574 = vadd.f32 0.0, %v573
        %v575 = vpop.f32.mrf.mxu0
        %v576 = vadd.f32 0.0, %v575
        %577 = vdwg.mxu0
        %v578 = vpack.c.bf16 %v576, %v574
        %v579 = vld [vmem:[%s5] sm:$0x1]
        %v580 = vld [vmem:[%s6] sm:$0x1]
        %v582 = vperm.slane %v580, 0
        %vm584 = vcmask 15360
        %v586 = vsel %vm584, %v578, 0
        %vm588 = vcmask 1040384
        %v590 = vsel %vm588, %v579, 0
        %592 = vmatpush.bf16.msra.mxu0 0
        %593 = vmatpush.bf16.msra.mxu0 0
        %594 = vmatpush.bf16.msra.mxu0 0
        %595 = vmatpush.bf16.msra.mxu0 0
        %596 = vmatpush.bf16.msra.mxu0 0
        %597 = vmatpush.bf16.msra.mxu0 0
        %598 = vmatpush.bf16.msra.mxu0 0
        %599 = vmatpush.bf16.msra.mxu0 %v590
        %600 = vmatmul.bf16.gmra.mxu0 %v586
        %v601 = vpop.f32.mrf.mxu0
        %v602 = vadd.f32 %v582, %v601
        %v603 = vpop.f32.mrf.mxu0
        %v604 = vadd.f32 %v582, %v603
        %605 = vdwg.mxu0
        %v606 = vmax.f32 %v602, 0.0
        %v607 = vmax.f32 %v604, 0.0
        %v608 = vand.u32 2147483647, %v602
        %v609 = vand.u32 2147483647, %v604
        %v610 = vsub.f32 0.0, %v608
        %v611 = vsub.f32 0.0, %v609
        %v612 = vmul.f32 %v610, 1.442695
        %v613 = vpow.pop %v612
        %v614 = vmul.f32 %v611, 1.442695
        %v615 = vpow.pop %v614
        %v616 = vadd.f32 %v613, 1.0
        %v617 = vlog2.pop %v616
        %v618 = vmul.f32 %v617, 0.6931472
        %v619 = vmul.f32 -0.5, %v613
        %v620 = vadd.f32 %v619, 1.0
        %v621 = vmul.f32 %v620, %v613
        %v622 = vand.u32 2147483647, %v613
        %vm623 = vcmp.lt.f32.partialorder %v622, 0.0004427343
        %v624 = vsel %vm623, %v621, %v618
        %v625 = vadd.f32 %v615, 1.0
        %v626 = vlog2.pop %v625
        %v627 = vmul.f32 %v626, 0.6931472
        %v628 = vmul.f32 -0.5, %v615
        %v629 = vadd.f32 %v628, 1.0
        %v630 = vmul.f32 %v629, %v615
        %v631 = vand.u32 2147483647, %v615
        %vm632 = vcmp.lt.f32.partialorder %v631, 0.0004427343
        %v633 = vsel %vm632, %v630, %v627
        %v634 = vadd.f32 %v606, %v624
        %v635 = vadd.f32 %v607, %v633
        %v636 = vmul.f32 %v634, %v525
        %v637 = vmul.f32 %v635, %v526
        %v638 = vld [vmem:[%s7] sm:$0xff]
        %v639 = vld [vmem:[%s7 + $0x8] sm:$0xff]
        %v640 = vmul.f32 %v638, 1.442695
        %v641 = vpow.pop %v640
        %v642 = vmul.f32 %v639, 1.442695
        %v643 = vpow.pop %v642
        %v644 = vsub.f32 0.0, %v641
        %v645 = vsub.f32 0.0, %v643
        %v648 = vrot.slane %v634, 1
        %v649 = vrot.slane %v634, 2
        %v650 = vrot.slane %v634, 3
        %v651 = vrot.slane %v634, 4
        %v652 = vrot.slane %v634, 5
        %v653 = vrot.slane %v634, 6
        %v654 = vrot.slane %v634, 7
        %v655 = vrot.slane %v635, 1
        %v656 = vrot.slane %v635, 2
        %v657 = vrot.slane %v635, 3
        %v658 = vrot.slane %v635, 4
        %v659 = vrot.slane %v635, 5
        %v660 = vrot.slane %v635, 6
        %v661 = vrot.slane %v635, 7
        %v662 = vperm.slane %v634, 0
        %v663 = vperm.slane %v648, 0
        %v664 = vperm.slane %v649, 0
        %v665 = vperm.slane %v650, 0
        %v666 = vperm.slane %v651, 0
        %v667 = vperm.slane %v652, 0
        %v668 = vperm.slane %v653, 0
        %v669 = vperm.slane %v654, 0
        %v670 = vperm.slane %v635, 0
        %v671 = vperm.slane %v655, 0
        %v672 = vperm.slane %v656, 0
        %v673 = vperm.slane %v657, 0
        %v674 = vperm.slane %v658, 0
        %v675 = vperm.slane %v659, 0
        %v676 = vperm.slane %v660, 0
        %v677 = vperm.slane %v661, 0
        %v694 = vmul.f32 %v662, %v644
        %v695 = vmul.f32 %v662, %v645
        %v696 = vmul.f32 %v663, %v644
        %v697 = vmul.f32 %v663, %v645
        %v698 = vmul.f32 %v664, %v644
        %v699 = vmul.f32 %v664, %v645
        %v700 = vmul.f32 %v665, %v644
        %v701 = vmul.f32 %v665, %v645
        %v702 = vmul.f32 %v666, %v644
        %v703 = vmul.f32 %v666, %v645
        %v704 = vmul.f32 %v667, %v644
        %v705 = vmul.f32 %v667, %v645
        %v706 = vmul.f32 %v668, %v644
        %v707 = vmul.f32 %v668, %v645
        %v708 = vmul.f32 %v669, %v644
        %v709 = vmul.f32 %v669, %v645
        %v710 = vmul.f32 %v670, %v644
        %v711 = vmul.f32 %v670, %v645
        %v712 = vmul.f32 %v671, %v644
        %v713 = vmul.f32 %v671, %v645
        %v714 = vmul.f32 %v672, %v644
        %v715 = vmul.f32 %v672, %v645
        %v716 = vmul.f32 %v673, %v644
        %v717 = vmul.f32 %v673, %v645
        %v718 = vmul.f32 %v674, %v644
        %v719 = vmul.f32 %v674, %v645
        %v720 = vmul.f32 %v675, %v644
        %v721 = vmul.f32 %v675, %v645
        %v722 = vmul.f32 %v676, %v644
        %v723 = vmul.f32 %v676, %v645
        %v724 = vmul.f32 %v677, %v644
        %v725 = vmul.f32 %v677, %v645
        %v726 = vmul.f32 %v694, 1.442695
        %v727 = vpow.pop %v726
        %v728 = vmul.f32 %v695, 1.442695
        %v729 = vpow.pop %v728
        %v730 = vmul.f32 %v696, 1.442695
        %v731 = vpow.pop %v730
        %v732 = vmul.f32 %v697, 1.442695
        %v733 = vpow.pop %v732
        %v734 = vmul.f32 %v698, 1.442695
        %v735 = vpow.pop %v734
        %v736 = vmul.f32 %v699, 1.442695
        %v737 = vpow.pop %v736
        %v738 = vmul.f32 %v700, 1.442695
        %v739 = vpow.pop %v738
        %v740 = vmul.f32 %v701, 1.442695
        %v741 = vpow.pop %v740
        %v742 = vmul.f32 %v702, 1.442695
        %v743 = vpow.pop %v742
        %v744 = vmul.f32 %v703, 1.442695
        %v745 = vpow.pop %v744
        %v746 = vmul.f32 %v704, 1.442695
        %v747 = vpow.pop %v746
        %v748 = vmul.f32 %v705, 1.442695
        %v749 = vpow.pop %v748
        %v750 = vmul.f32 %v706, 1.442695
        %v751 = vpow.pop %v750
        %v752 = vmul.f32 %v707, 1.442695
        %v753 = vpow.pop %v752
        %v754 = vmul.f32 %v708, 1.442695
        %v755 = vpow.pop %v754
        %v756 = vmul.f32 %v709, 1.442695
        %v757 = vpow.pop %v756
        %v758 = vmul.f32 %v710, 1.442695
        %v759 = vpow.pop %v758
        %v760 = vmul.f32 %v711, 1.442695
        %v761 = vpow.pop %v760
        %v762 = vmul.f32 %v712, 1.442695
        %v763 = vpow.pop %v762
        %v764 = vmul.f32 %v713, 1.442695
        %v765 = vpow.pop %v764
        %v766 = vmul.f32 %v714, 1.442695
        %v767 = vpow.pop %v766
        %v768 = vmul.f32 %v715, 1.442695
        %v769 = vpow.pop %v768
        %v770 = vmul.f32 %v716, 1.442695
        %v771 = vpow.pop %v770
        %v772 = vmul.f32 %v717, 1.442695
        %v773 = vpow.pop %v772
        %v774 = vmul.f32 %v718, 1.442695
        %v775 = vpow.pop %v774
        %v776 = vmul.f32 %v719, 1.442695
        %v777 = vpow.pop %v776
        %v778 = vmul.f32 %v720, 1.442695
        %v779 = vpow.pop %v778
        %v780 = vmul.f32 %v721, 1.442695
        %v781 = vpow.pop %v780
        %v782 = vmul.f32 %v722, 1.442695
        %v783 = vpow.pop %v782
        %v784 = vmul.f32 %v723, 1.442695
        %v785 = vpow.pop %v784
        %v786 = vmul.f32 %v724, 1.442695
        %v787 = vpow.pop %v786
        %v788 = vmul.f32 %v725, 1.442695
        %v789 = vpow.pop %v788
        %v790 = vperm.slane %v574, 0
        %v791 = vlaneseq
        %v792 = vshrl.u32 %v791, 7
        %v793 = vadd.s32 %v792, 2
        %794 = vset.pattern.permute.xlu0 %v793
        %795 = vperm.xlu0 %794, %v790
        %v796 = vpop.permute.xlu0 %795
        %v797 = vlaneseq
        %v798 = vshrl.u32 %v797, 7
        %v799 = vadd.s32 %v798, 10
        %800 = vset.pattern.permute.xlu0 %v799
        %801 = vperm.xlu0 %800, %v790
        %v802 = vpop.permute.xlu0 %801
        %v803 = vperm.slane %v574, 1
        %v804 = vlaneseq
        %v805 = vshrl.u32 %v804, 7
        %v806 = vadd.s32 %v805, 2
        %807 = vset.pattern.permute.xlu0 %v806
        %808 = vperm.xlu0 %807, %v803
        %v809 = vpop.permute.xlu0 %808
        %v810 = vlaneseq
        %v811 = vshrl.u32 %v810, 7
        %v812 = vadd.s32 %v811, 10
        %813 = vset.pattern.permute.xlu0 %v812
        %814 = vperm.xlu0 %813, %v803
        %v815 = vpop.permute.xlu0 %814
        %v816 = vperm.slane %v574, 2
        %v817 = vlaneseq
        %v818 = vshrl.u32 %v817, 7
        %v819 = vadd.s32 %v818, 2
        %820 = vset.pattern.permute.xlu0 %v819
        %821 = vperm.xlu0 %820, %v816
        %v822 = vpop.permute.xlu0 %821
        %v823 = vlaneseq
        %v824 = vshrl.u32 %v823, 7
        %v825 = vadd.s32 %v824, 10
        %826 = vset.pattern.permute.xlu0 %v825
        %827 = vperm.xlu0 %826, %v816
        %v828 = vpop.permute.xlu0 %827
        %v829 = vperm.slane %v574, 3
        %v830 = vlaneseq
        %v831 = vshrl.u32 %v830, 7
        %v832 = vadd.s32 %v831, 2
        %833 = vset.pattern.permute.xlu0 %v832
        %834 = vperm.xlu0 %833, %v829
        %v835 = vpop.permute.xlu0 %834
        %v836 = vlaneseq
        %v837 = vshrl.u32 %v836, 7
        %v838 = vadd.s32 %v837, 10
        %839 = vset.pattern.permute.xlu0 %v838
        %840 = vperm.xlu0 %839, %v829
        %v841 = vpop.permute.xlu0 %840
        %v842 = vperm.slane %v574, 4
        %v843 = vlaneseq
        %v844 = vshrl.u32 %v843, 7
        %v845 = vadd.s32 %v844, 2
        %846 = vset.pattern.permute.xlu0 %v845
        %847 = vperm.xlu0 %846, %v842
        %v848 = vpop.permute.xlu0 %847
        %v849 = vlaneseq
        %v850 = vshrl.u32 %v849, 7
        %v851 = vadd.s32 %v850, 10
        %852 = vset.pattern.permute.xlu0 %v851
        %853 = vperm.xlu0 %852, %v842
        %v854 = vpop.permute.xlu0 %853
        %v855 = vperm.slane %v574, 5
        %v856 = vlaneseq
        %v857 = vshrl.u32 %v856, 7
        %v858 = vadd.s32 %v857, 2
        %859 = vset.pattern.permute.xlu0 %v858
        %860 = vperm.xlu0 %859, %v855
        %v861 = vpop.permute.xlu0 %860
        %v862 = vlaneseq
        %v863 = vshrl.u32 %v862, 7
        %v864 = vadd.s32 %v863, 10
        %865 = vset.pattern.permute.xlu0 %v864
        %866 = vperm.xlu0 %865, %v855
        %v867 = vpop.permute.xlu0 %866
        %v868 = vperm.slane %v574, 6
        %v869 = vlaneseq
        %v870 = vshrl.u32 %v869, 7
        %v871 = vadd.s32 %v870, 2
        %872 = vset.pattern.permute.xlu0 %v871
        %873 = vperm.xlu0 %872, %v868
        %v874 = vpop.permute.xlu0 %873
        %v875 = vlaneseq
        %v876 = vshrl.u32 %v875, 7
        %v877 = vadd.s32 %v876, 10
        %878 = vset.pattern.permute.xlu0 %v877
        %879 = vperm.xlu0 %878, %v868
        %v880 = vpop.permute.xlu0 %879
        %v881 = vperm.slane %v574, 7
        %v882 = vlaneseq
        %v883 = vshrl.u32 %v882, 7
        %v884 = vadd.s32 %v883, 2
        %885 = vset.pattern.permute.xlu0 %v884
        %886 = vperm.xlu0 %885, %v881
        %v887 = vpop.permute.xlu0 %886
        %v888 = vlaneseq
        %v889 = vshrl.u32 %v888, 7
        %v890 = vadd.s32 %v889, 10
        %891 = vset.pattern.permute.xlu0 %v890
        %892 = vperm.xlu0 %891, %v881
        %v893 = vpop.permute.xlu0 %892
        %v894 = vperm.slane %v576, 0
        %v895 = vlaneseq
        %v896 = vshrl.u32 %v895, 7
        %v897 = vadd.s32 %v896, 2
        %898 = vset.pattern.permute.xlu0 %v897
        %899 = vperm.xlu0 %898, %v894
        %v900 = vpop.permute.xlu0 %899
        %v901 = vlaneseq
        %v902 = vshrl.u32 %v901, 7
        %v903 = vadd.s32 %v902, 10
        %904 = vset.pattern.permute.xlu0 %v903
        %905 = vperm.xlu0 %904, %v894
        %v906 = vpop.permute.xlu0 %905
        %v907 = vperm.slane %v576, 1
        %v908 = vlaneseq
        %v909 = vshrl.u32 %v908, 7
        %v910 = vadd.s32 %v909, 2
        %911 = vset.pattern.permute.xlu0 %v910
        %912 = vperm.xlu0 %911, %v907
        %v913 = vpop.permute.xlu0 %912
        %v914 = vlaneseq
        %v915 = vshrl.u32 %v914, 7
        %v916 = vadd.s32 %v915, 10
        %917 = vset.pattern.permute.xlu0 %v916
        %918 = vperm.xlu0 %917, %v907
        %v919 = vpop.permute.xlu0 %918
        %v920 = vperm.slane %v576, 2
        %v921 = vlaneseq
        %v922 = vshrl.u32 %v921, 7
        %v923 = vadd.s32 %v922, 2
        %924 = vset.pattern.permute.xlu0 %v923
        %925 = vperm.xlu0 %924, %v920
        %v926 = vpop.permute.xlu0 %925
        %v927 = vlaneseq
        %v928 = vshrl.u32 %v927, 7
        %v929 = vadd.s32 %v928, 10
        %930 = vset.pattern.permute.xlu0 %v929
        %931 = vperm.xlu0 %930, %v920
        %v932 = vpop.permute.xlu0 %931
        %v933 = vperm.slane %v576, 3
        %v934 = vlaneseq
        %v935 = vshrl.u32 %v934, 7
        %v936 = vadd.s32 %v935, 2
        %937 = vset.pattern.permute.xlu0 %v936
        %938 = vperm.xlu0 %937, %v933
        %v939 = vpop.permute.xlu0 %938
        %v940 = vlaneseq
        %v941 = vshrl.u32 %v940, 7
        %v942 = vadd.s32 %v941, 10
        %943 = vset.pattern.permute.xlu0 %v942
        %944 = vperm.xlu0 %943, %v933
        %v945 = vpop.permute.xlu0 %944
        %v946 = vperm.slane %v576, 4
        %v947 = vlaneseq
        %v948 = vshrl.u32 %v947, 7
        %v949 = vadd.s32 %v948, 2
        %950 = vset.pattern.permute.xlu0 %v949
        %951 = vperm.xlu0 %950, %v946
        %v952 = vpop.permute.xlu0 %951
        %v953 = vlaneseq
        %v954 = vshrl.u32 %v953, 7
        %v955 = vadd.s32 %v954, 10
        %956 = vset.pattern.permute.xlu0 %v955
        %957 = vperm.xlu0 %956, %v946
        %v958 = vpop.permute.xlu0 %957
        %v959 = vperm.slane %v576, 5
        %v960 = vlaneseq
        %v961 = vshrl.u32 %v960, 7
        %v962 = vadd.s32 %v961, 2
        %963 = vset.pattern.permute.xlu0 %v962
        %964 = vperm.xlu0 %963, %v959
        %v965 = vpop.permute.xlu0 %964
        %v966 = vlaneseq
        %v967 = vshrl.u32 %v966, 7
        %v968 = vadd.s32 %v967, 10
        %969 = vset.pattern.permute.xlu0 %v968
        %970 = vperm.xlu0 %969, %v959
        %v971 = vpop.permute.xlu0 %970
        %v972 = vperm.slane %v576, 6
        %v973 = vlaneseq
        %v974 = vshrl.u32 %v973, 7
        %v975 = vadd.s32 %v974, 2
        %976 = vset.pattern.permute.xlu0 %v975
        %977 = vperm.xlu0 %976, %v972
        %v978 = vpop.permute.xlu0 %977
        %v979 = vlaneseq
        %v980 = vshrl.u32 %v979, 7
        %v981 = vadd.s32 %v980, 10
        %982 = vset.pattern.permute.xlu0 %v981
        %983 = vperm.xlu0 %982, %v972
        %v984 = vpop.permute.xlu0 %983
        %v985 = vperm.slane %v576, 7
        %v986 = vlaneseq
        %v987 = vshrl.u32 %v986, 7
        %v988 = vadd.s32 %v987, 2
        %989 = vset.pattern.permute.xlu0 %v988
        %990 = vperm.xlu0 %989, %v985
        %v991 = vpop.permute.xlu0 %990
        %v992 = vlaneseq
        %v993 = vshrl.u32 %v992, 7
        %v994 = vadd.s32 %v993, 10
        %995 = vset.pattern.permute.xlu0 %v994
        %996 = vperm.xlu0 %995, %v985
        %v997 = vpop.permute.xlu0 %996
        %v1000 = vrot.slane %v636, 1
        %v1001 = vrot.slane %v636, 2
        %v1002 = vrot.slane %v636, 3
        %v1003 = vrot.slane %v636, 4
        %v1004 = vrot.slane %v636, 5
        %v1005 = vrot.slane %v636, 6
        %v1006 = vrot.slane %v636, 7
        %v1007 = vrot.slane %v637, 1
        %v1008 = vrot.slane %v637, 2
        %v1009 = vrot.slane %v637, 3
        %v1010 = vrot.slane %v637, 4
        %v1011 = vrot.slane %v637, 5
        %v1012 = vrot.slane %v637, 6
        %v1013 = vrot.slane %v637, 7
        %v1014 = vperm.slane %v636, 0
        %v1015 = vperm.slane %v1000, 0
        %v1016 = vperm.slane %v1001, 0
        %v1017 = vperm.slane %v1002, 0
        %v1018 = vperm.slane %v1003, 0
        %v1019 = vperm.slane %v1004, 0
        %v1020 = vperm.slane %v1005, 0
        %v1021 = vperm.slane %v1006, 0
        %v1022 = vperm.slane %v637, 0
        %v1023 = vperm.slane %v1007, 0
        %v1024 = vperm.slane %v1008, 0
        %v1025 = vperm.slane %v1009, 0
        %v1026 = vperm.slane %v1010, 0
        %v1027 = vperm.slane %v1011, 0
        %v1028 = vperm.slane %v1012, 0
        %v1029 = vperm.slane %v1013, 0
        %v1046 = vmul.f32 %v796, %v1014
        %v1047 = vmul.f32 %v802, %v1014
        %v1048 = vmul.f32 %v809, %v1015
        %v1049 = vmul.f32 %v815, %v1015
        %v1050 = vmul.f32 %v822, %v1016
        %v1051 = vmul.f32 %v828, %v1016
        %v1052 = vmul.f32 %v835, %v1017
        %v1053 = vmul.f32 %v841, %v1017
        %v1054 = vmul.f32 %v848, %v1018
        %v1055 = vmul.f32 %v854, %v1018
        %v1056 = vmul.f32 %v861, %v1019
        %v1057 = vmul.f32 %v867, %v1019
        %v1058 = vmul.f32 %v874, %v1020
        %v1059 = vmul.f32 %v880, %v1020
        %v1060 = vmul.f32 %v887, %v1021
        %v1061 = vmul.f32 %v893, %v1021
        %v1062 = vmul.f32 %v900, %v1022
        %v1063 = vmul.f32 %v906, %v1022
        %v1064 = vmul.f32 %v913, %v1023
        %v1065 = vmul.f32 %v919, %v1023
        %v1066 = vmul.f32 %v926, %v1024
        %v1067 = vmul.f32 %v932, %v1024
        %v1068 = vmul.f32 %v939, %v1025
        %v1069 = vmul.f32 %v945, %v1025
        %v1070 = vmul.f32 %v952, %v1026
        %v1071 = vmul.f32 %v958, %v1026
        %v1072 = vmul.f32 %v965, %v1027
        %v1073 = vmul.f32 %v971, %v1027
        %v1074 = vmul.f32 %v978, %v1028
        %v1075 = vmul.f32 %v984, %v1028
        %v1076 = vmul.f32 %v991, %v1029
        %v1077 = vmul.f32 %v997, %v1029
        %v1078 = vmul.f32 %v727, 0.0
        %v1079 = vmul.f32 %v729, 0.0
        %v1080 = vmul.f32 %v731, 0.0
        %v1081 = vmul.f32 %v733, 0.0
        %v1082 = vadd.f32 %v1078, %v1046
        %v1083 = vadd.f32 %v1079, %v1047
        %v1084 = vadd.f32 %v1080, %v1048
        %v1085 = vadd.f32 %v1081, %v1049
        %v1086 = vlaneseq
        %v1087 = vshrl.u32 %v1086, 7
        %v1088 = vadd.s32 %v1087, 18
        %1089 = vset.pattern.permute.xlu0 %v1088
        %1090 = vperm.xlu0 %1089, %v790
        %v1091 = vpop.permute.xlu0 %1090
        %v1092 = vlaneseq
        %v1093 = vshrl.u32 %v1092, 7
        %v1094 = vadd.s32 %v1093, 26
        %1095 = vset.pattern.permute.xlu0 %v1094
        %1096 = vperm.xlu0 %1095, %v790
        %v1097 = vpop.permute.xlu0 %1096
        %v1098 = vlaneseq
        %v1099 = vshrl.u32 %v1098, 7
        %v1100 = vadd.s32 %v1099, 18
        %1101 = vset.pattern.permute.xlu0 %v1100
        %1102 = vperm.xlu0 %1101, %v803
        %v1103 = vpop.permute.xlu0 %1102
        %v1104 = vlaneseq
        %v1105 = vshrl.u32 %v1104, 7
        %v1106 = vadd.s32 %v1105, 26
        %1107 = vset.pattern.permute.xlu0 %v1106
        %1108 = vperm.xlu0 %1107, %v803
        %v1109 = vpop.permute.xlu0 %1108
        %v1110 = vmul.f32 %v1091, %v1082
        %v1111 = vmul.f32 %v1097, %v1083
        %v1112 = vmul.f32 %v1103, %v1084
        %v1113 = vmul.f32 %v1109, %v1085
        %v1114 = vsel %vm560, %v1110, 0.0
        %v1115 = vsel %vm560, %v1111, 0.0
        %v1116 = vadd.f32 %v1114, %v1115
        %v1117 = vrot.slane %v1116, 4
        %v1118 = vadd.f32 %v1116, %v1117
        %v1119 = vrot.slane %v1118, 2
        %v1120 = vadd.f32 %v1118, %v1119
        %v1121 = vrot.slane %v1120, 1
        %v1122 = vadd.f32 %v1120, %v1121
        %v1123 = vsel %vm560, %v1112, 0.0
        %v1124 = vsel %vm560, %v1113, 0.0
        %v1125 = vadd.f32 %v1123, %v1124
        %v1126 = vrot.slane %v1125, 4
        %v1127 = vadd.f32 %v1125, %v1126
        %v1128 = vrot.slane %v1127, 2
        %v1129 = vadd.f32 %v1127, %v1128
        %v1130 = vrot.slane %v1129, 1
        %v1131 = vadd.f32 %v1129, %v1130
        %v1132 = vmul.f32 %v735, %v1082
        %v1133 = vmul.f32 %v737, %v1083
        %v1134 = vmul.f32 %v739, %v1084
        %v1135 = vmul.f32 %v741, %v1085
        %v1136 = vadd.f32 %v1132, %v1050
        %v1137 = vadd.f32 %v1133, %v1051
        %v1138 = vadd.f32 %v1134, %v1052
        %v1139 = vadd.f32 %v1135, %v1053
        %v1140 = vlaneseq
        %v1141 = vshrl.u32 %v1140, 7
        %v1142 = vadd.s32 %v1141, 18
        %1143 = vset.pattern.permute.xlu0 %v1142
        %1144 = vperm.xlu0 %1143, %v816
        %v1145 = vpop.permute.xlu0 %1144
        %v1146 = vlaneseq
        %v1147 = vshrl.u32 %v1146, 7
        %v1148 = vadd.s32 %v1147, 26
        %1149 = vset.pattern.permute.xlu0 %v1148
        %1150 = vperm.xlu0 %1149, %v816
        %v1151 = vpop.permute.xlu0 %1150
        %v1152 = vlaneseq
        %v1153 = vshrl.u32 %v1152, 7
        %v1154 = vadd.s32 %v1153, 18
        %1155 = vset.pattern.permute.xlu0 %v1154
        %1156 = vperm.xlu0 %1155, %v829
        %v1157 = vpop.permute.xlu0 %1156
        %v1158 = vlaneseq
        %v1159 = vshrl.u32 %v1158, 7
        %v1160 = vadd.s32 %v1159, 26
        %1161 = vset.pattern.permute.xlu0 %v1160
        %1162 = vperm.xlu0 %1161, %v829
        %v1163 = vpop.permute.xlu0 %1162
        %v1164 = vmul.f32 %v1145, %v1136
        %v1165 = vmul.f32 %v1151, %v1137
        %v1166 = vmul.f32 %v1157, %v1138
        %v1167 = vmul.f32 %v1163, %v1139
        %v1168 = vsel %vm560, %v1164, 0.0
        %v1169 = vsel %vm560, %v1165, 0.0
        %v1170 = vadd.f32 %v1168, %v1169
        %v1171 = vrot.slane %v1170, 4
        %v1172 = vadd.f32 %v1170, %v1171
        %v1173 = vrot.slane %v1172, 2
        %v1174 = vadd.f32 %v1172, %v1173
        %v1175 = vrot.slane %v1174, 1
        %v1176 = vadd.f32 %v1174, %v1175
        %v1177 = vsel %vm560, %v1166, 0.0
        %v1178 = vsel %vm560, %v1167, 0.0
        %v1179 = vadd.f32 %v1177, %v1178
        %v1180 = vrot.slane %v1179, 4
        %v1181 = vadd.f32 %v1179, %v1180
        %v1182 = vrot.slane %v1181, 2
        %v1183 = vadd.f32 %v1181, %v1182
        %v1184 = vrot.slane %v1183, 1
        %v1185 = vadd.f32 %v1183, %v1184
        %v1186 = vmul.f32 %v743, %v1136
        %v1187 = vmul.f32 %v745, %v1137
        %v1188 = vmul.f32 %v747, %v1138
        %v1189 = vmul.f32 %v749, %v1139
        %v1190 = vadd.f32 %v1186, %v1054
        %v1191 = vadd.f32 %v1187, %v1055
        %v1192 = vadd.f32 %v1188, %v1056
        %v1193 = vadd.f32 %v1189, %v1057
        %v1194 = vlaneseq
        %v1195 = vshrl.u32 %v1194, 7
        %v1196 = vadd.s32 %v1195, 18
        %1197 = vset.pattern.permute.xlu0 %v1196
        %1198 = vperm.xlu0 %1197, %v842
        %v1199 = vpop.permute.xlu0 %1198
        %v1200 = vlaneseq
        %v1201 = vshrl.u32 %v1200, 7
        %v1202 = vadd.s32 %v1201, 26
        %1203 = vset.pattern.permute.xlu0 %v1202
        %1204 = vperm.xlu0 %1203, %v842
        %v1205 = vpop.permute.xlu0 %1204
        %v1206 = vlaneseq
        %v1207 = vshrl.u32 %v1206, 7
        %v1208 = vadd.s32 %v1207, 18
        %1209 = vset.pattern.permute.xlu0 %v1208
        %1210 = vperm.xlu0 %1209, %v855
        %v1211 = vpop.permute.xlu0 %1210
        %v1212 = vlaneseq
        %v1213 = vshrl.u32 %v1212, 7
        %v1214 = vadd.s32 %v1213, 26
        %1215 = vset.pattern.permute.xlu0 %v1214
        %1216 = vperm.xlu0 %1215, %v855
        %v1217 = vpop.permute.xlu0 %1216
        %v1218 = vmul.f32 %v1199, %v1190
        %v1219 = vmul.f32 %v1205, %v1191
        %v1220 = vmul.f32 %v1211, %v1192
        %v1221 = vmul.f32 %v1217, %v1193
        %v1222 = vsel %vm560, %v1218, 0.0
        %v1223 = vsel %vm560, %v1219, 0.0
        %v1224 = vadd.f32 %v1222, %v1223
        %v1225 = vrot.slane %v1224, 4
        %v1226 = vadd.f32 %v1224, %v1225
        %v1227 = vrot.slane %v1226, 2
        %v1228 = vadd.f32 %v1226, %v1227
        %v1229 = vrot.slane %v1228, 1
        %v1230 = vadd.f32 %v1228, %v1229
        %v1231 = vsel %vm560, %v1220, 0.0
        %v1232 = vsel %vm560, %v1221, 0.0
        %v1233 = vadd.f32 %v1231, %v1232
        %v1234 = vrot.slane %v1233, 4
        %v1235 = vadd.f32 %v1233, %v1234
        %v1236 = vrot.slane %v1235, 2
        %v1237 = vadd.f32 %v1235, %v1236
        %v1238 = vrot.slane %v1237, 1
        %v1239 = vadd.f32 %v1237, %v1238
        %v1240 = vmul.f32 %v751, %v1190
        %v1241 = vmul.f32 %v753, %v1191
        %v1242 = vmul.f32 %v755, %v1192
        %v1243 = vmul.f32 %v757, %v1193
        %v1244 = vadd.f32 %v1240, %v1058
        %v1245 = vadd.f32 %v1241, %v1059
        %v1246 = vadd.f32 %v1242, %v1060
        %v1247 = vadd.f32 %v1243, %v1061
        %v1248 = vlaneseq
        %v1249 = vshrl.u32 %v1248, 7
        %v1250 = vadd.s32 %v1249, 18
        %1251 = vset.pattern.permute.xlu0 %v1250
        %1252 = vperm.xlu0 %1251, %v868
        %v1253 = vpop.permute.xlu0 %1252
        %v1254 = vlaneseq
        %v1255 = vshrl.u32 %v1254, 7
        %v1256 = vadd.s32 %v1255, 26
        %1257 = vset.pattern.permute.xlu0 %v1256
        %1258 = vperm.xlu0 %1257, %v868
        %v1259 = vpop.permute.xlu0 %1258
        %v1260 = vlaneseq
        %v1261 = vshrl.u32 %v1260, 7
        %v1262 = vadd.s32 %v1261, 18
        %1263 = vset.pattern.permute.xlu0 %v1262
        %1264 = vperm.xlu0 %1263, %v881
        %v1265 = vpop.permute.xlu0 %1264
        %v1266 = vlaneseq
        %v1267 = vshrl.u32 %v1266, 7
        %v1268 = vadd.s32 %v1267, 26
        %1269 = vset.pattern.permute.xlu0 %v1268
        %1270 = vperm.xlu0 %1269, %v881
        %v1271 = vpop.permute.xlu0 %1270
        %v1272 = vmul.f32 %v1253, %v1244
        %v1273 = vmul.f32 %v1259, %v1245
        %v1274 = vmul.f32 %v1265, %v1246
        %v1275 = vmul.f32 %v1271, %v1247
        %v1276 = vsel %vm560, %v1272, 0.0
        %v1277 = vsel %vm560, %v1273, 0.0
        %v1278 = vadd.f32 %v1276, %v1277
        %v1279 = vrot.slane %v1278, 4
        %v1280 = vadd.f32 %v1278, %v1279
        %v1281 = vrot.slane %v1280, 2
        %v1282 = vadd.f32 %v1280, %v1281
        %v1283 = vrot.slane %v1282, 1
        %v1284 = vadd.f32 %v1282, %v1283
        %v1285 = vsel %vm560, %v1274, 0.0
        %v1286 = vsel %vm560, %v1275, 0.0
        %v1287 = vadd.f32 %v1285, %v1286
        %v1288 = vrot.slane %v1287, 4
        %v1289 = vadd.f32 %v1287, %v1288
        %v1290 = vrot.slane %v1289, 2
        %v1291 = vadd.f32 %v1289, %v1290
        %v1292 = vrot.slane %v1291, 1
        %v1293 = vadd.f32 %v1291, %v1292
        %v1294 = vmul.f32 %v759, %v1244
        %v1295 = vmul.f32 %v761, %v1245
        %v1296 = vmul.f32 %v763, %v1246
        %v1297 = vmul.f32 %v765, %v1247
        %v1298 = vadd.f32 %v1294, %v1062
        %v1299 = vadd.f32 %v1295, %v1063
        %v1300 = vadd.f32 %v1296, %v1064
        %v1301 = vadd.f32 %v1297, %v1065
        %v1302 = vlaneseq
        %v1303 = vshrl.u32 %v1302, 7
        %v1304 = vadd.s32 %v1303, 18
        %1305 = vset.pattern.permute.xlu0 %v1304
        %1306 = vperm.xlu0 %1305, %v894
        %v1307 = vpop.permute.xlu0 %1306
        %v1308 = vlaneseq
        %v1309 = vshrl.u32 %v1308, 7
        %v1310 = vadd.s32 %v1309, 26
        %1311 = vset.pattern.permute.xlu0 %v1310
        %1312 = vperm.xlu0 %1311, %v894
        %v1313 = vpop.permute.xlu0 %1312
        %v1314 = vlaneseq
        %v1315 = vshrl.u32 %v1314, 7
        %v1316 = vadd.s32 %v1315, 18
        %1317 = vset.pattern.permute.xlu0 %v1316
        %1318 = vperm.xlu0 %1317, %v907
        %v1319 = vpop.permute.xlu0 %1318
        %v1320 = vlaneseq
        %v1321 = vshrl.u32 %v1320, 7
        %v1322 = vadd.s32 %v1321, 26
        %1323 = vset.pattern.permute.xlu0 %v1322
        %1324 = vperm.xlu0 %1323, %v907
        %v1325 = vpop.permute.xlu0 %1324
        %v1326 = vmul.f32 %v1307, %v1298
        %v1327 = vmul.f32 %v1313, %v1299
        %v1328 = vmul.f32 %v1319, %v1300
        %v1329 = vmul.f32 %v1325, %v1301
        %v1330 = vsel %vm560, %v1326, 0.0
        %v1331 = vsel %vm560, %v1327, 0.0
        %v1332 = vadd.f32 %v1330, %v1331
        %v1333 = vrot.slane %v1332, 4
        %v1334 = vadd.f32 %v1332, %v1333
        %v1335 = vrot.slane %v1334, 2
        %v1336 = vadd.f32 %v1334, %v1335
        %v1337 = vrot.slane %v1336, 1
        %v1338 = vadd.f32 %v1336, %v1337
        %v1339 = vsel %vm560, %v1328, 0.0
        %v1340 = vsel %vm560, %v1329, 0.0
        %v1341 = vadd.f32 %v1339, %v1340
        %v1342 = vrot.slane %v1341, 4
        %v1343 = vadd.f32 %v1341, %v1342
        %v1344 = vrot.slane %v1343, 2
        %v1345 = vadd.f32 %v1343, %v1344
        %v1346 = vrot.slane %v1345, 1
        %v1347 = vadd.f32 %v1345, %v1346
        %v1348 = vmul.f32 %v767, %v1298
        %v1349 = vmul.f32 %v769, %v1299
        %v1350 = vmul.f32 %v771, %v1300
        %v1351 = vmul.f32 %v773, %v1301
        %v1352 = vadd.f32 %v1348, %v1066
        %v1353 = vadd.f32 %v1349, %v1067
        %v1354 = vadd.f32 %v1350, %v1068
        %v1355 = vadd.f32 %v1351, %v1069
        %v1356 = vlaneseq
        %v1357 = vshrl.u32 %v1356, 7
        %v1358 = vadd.s32 %v1357, 18
        %1359 = vset.pattern.permute.xlu0 %v1358
        %1360 = vperm.xlu0 %1359, %v920
        %v1361 = vpop.permute.xlu0 %1360
        %v1362 = vlaneseq
        %v1363 = vshrl.u32 %v1362, 7
        %v1364 = vadd.s32 %v1363, 26
        %1365 = vset.pattern.permute.xlu0 %v1364
        %1366 = vperm.xlu0 %1365, %v920
        %v1367 = vpop.permute.xlu0 %1366
        %v1368 = vlaneseq
        %v1369 = vshrl.u32 %v1368, 7
        %v1370 = vadd.s32 %v1369, 18
        %1371 = vset.pattern.permute.xlu0 %v1370
        %1372 = vperm.xlu0 %1371, %v933
        %v1373 = vpop.permute.xlu0 %1372
        %v1374 = vlaneseq
        %v1375 = vshrl.u32 %v1374, 7
        %v1376 = vadd.s32 %v1375, 26
        %1377 = vset.pattern.permute.xlu0 %v1376
        %1378 = vperm.xlu0 %1377, %v933
        %v1379 = vpop.permute.xlu0 %1378
        %v1380 = vmul.f32 %v1361, %v1352
        %v1381 = vmul.f32 %v1367, %v1353
        %v1382 = vmul.f32 %v1373, %v1354
        %v1383 = vmul.f32 %v1379, %v1355
        %v1384 = vsel %vm560, %v1380, 0.0
        %v1385 = vsel %vm560, %v1381, 0.0
        %v1386 = vadd.f32 %v1384, %v1385
        %v1387 = vrot.slane %v1386, 4
        %v1388 = vadd.f32 %v1386, %v1387
        %v1389 = vrot.slane %v1388, 2
        %v1390 = vadd.f32 %v1388, %v1389
        %v1391 = vrot.slane %v1390, 1
        %v1392 = vadd.f32 %v1390, %v1391
        %v1393 = vsel %vm560, %v1382, 0.0
        %v1394 = vsel %vm560, %v1383, 0.0
        %v1395 = vadd.f32 %v1393, %v1394
        %v1396 = vrot.slane %v1395, 4
        %v1397 = vadd.f32 %v1395, %v1396
        %v1398 = vrot.slane %v1397, 2
        %v1399 = vadd.f32 %v1397, %v1398
        %v1400 = vrot.slane %v1399, 1
        %v1401 = vadd.f32 %v1399, %v1400
        %v1402 = vmul.f32 %v775, %v1352
        %v1403 = vmul.f32 %v777, %v1353
        %v1404 = vmul.f32 %v779, %v1354
        %v1405 = vmul.f32 %v781, %v1355
        %v1406 = vadd.f32 %v1402, %v1070
        %v1407 = vadd.f32 %v1403, %v1071
        %v1408 = vadd.f32 %v1404, %v1072
        %v1409 = vadd.f32 %v1405, %v1073
        %v1410 = vlaneseq
        %v1411 = vshrl.u32 %v1410, 7
        %v1412 = vadd.s32 %v1411, 18
        %1413 = vset.pattern.permute.xlu0 %v1412
        %1414 = vperm.xlu0 %1413, %v946
        %v1415 = vpop.permute.xlu0 %1414
        %v1416 = vlaneseq
        %v1417 = vshrl.u32 %v1416, 7
        %v1418 = vadd.s32 %v1417, 26
        %1419 = vset.pattern.permute.xlu0 %v1418
        %1420 = vperm.xlu0 %1419, %v946
        %v1421 = vpop.permute.xlu0 %1420
        %v1422 = vlaneseq
        %v1423 = vshrl.u32 %v1422, 7
        %v1424 = vadd.s32 %v1423, 18
        %1425 = vset.pattern.permute.xlu0 %v1424
        %1426 = vperm.xlu0 %1425, %v959
        %v1427 = vpop.permute.xlu0 %1426
        %v1428 = vlaneseq
        %v1429 = vshrl.u32 %v1428, 7
        %v1430 = vadd.s32 %v1429, 26
        %1431 = vset.pattern.permute.xlu0 %v1430
        %1432 = vperm.xlu0 %1431, %v959
        %v1433 = vpop.permute.xlu0 %1432
        %v1434 = vmul.f32 %v1415, %v1406
        %v1435 = vmul.f32 %v1421, %v1407
        %v1436 = vmul.f32 %v1427, %v1408
        %v1437 = vmul.f32 %v1433, %v1409
        %v1438 = vsel %vm560, %v1434, 0.0
        %v1439 = vsel %vm560, %v1435, 0.0
        %v1440 = vadd.f32 %v1438, %v1439
        %v1441 = vrot.slane %v1440, 4
        %v1442 = vadd.f32 %v1440, %v1441
        %v1443 = vrot.slane %v1442, 2
        %v1444 = vadd.f32 %v1442, %v1443
        %v1445 = vrot.slane %v1444, 1
        %v1446 = vadd.f32 %v1444, %v1445
        %v1447 = vsel %vm560, %v1436, 0.0
        %v1448 = vsel %vm560, %v1437, 0.0
        %v1449 = vadd.f32 %v1447, %v1448
        %v1450 = vrot.slane %v1449, 4
        %v1451 = vadd.f32 %v1449, %v1450
        %v1452 = vrot.slane %v1451, 2
        %v1453 = vadd.f32 %v1451, %v1452
        %v1454 = vrot.slane %v1453, 1
        %v1455 = vadd.f32 %v1453, %v1454
        %v1456 = vmul.f32 %v783, %v1406
        %v1457 = vmul.f32 %v785, %v1407
        %v1458 = vmul.f32 %v787, %v1408
        %v1459 = vmul.f32 %v789, %v1409
        %v1460 = vadd.f32 %v1456, %v1074
        %v1461 = vadd.f32 %v1457, %v1075
        %v1462 = vadd.f32 %v1458, %v1076
        %v1463 = vadd.f32 %v1459, %v1077
        %v1464 = vlaneseq
        %v1465 = vshrl.u32 %v1464, 7
        %v1466 = vadd.s32 %v1465, 18
        %1467 = vset.pattern.permute.xlu0 %v1466
        %1468 = vperm.xlu0 %1467, %v972
        %v1469 = vpop.permute.xlu0 %1468
        %v1470 = vlaneseq
        %v1471 = vshrl.u32 %v1470, 7
        %v1472 = vadd.s32 %v1471, 26
        %1473 = vset.pattern.permute.xlu0 %v1472
        %1474 = vperm.xlu0 %1473, %v972
        %v1475 = vpop.permute.xlu0 %1474
        %v1476 = vlaneseq
        %v1477 = vshrl.u32 %v1476, 7
        %v1478 = vadd.s32 %v1477, 18
        %1479 = vset.pattern.permute.xlu0 %v1478
        %1480 = vperm.xlu0 %1479, %v985
        %v1481 = vpop.permute.xlu0 %1480
        %v1482 = vlaneseq
        %v1483 = vshrl.u32 %v1482, 7
        %v1484 = vadd.s32 %v1483, 26
        %1485 = vset.pattern.permute.xlu0 %v1484
        %1486 = vperm.xlu0 %1485, %v985
        %v1487 = vpop.permute.xlu0 %1486
        %v1488 = vmul.f32 %v1469, %v1460
        %v1489 = vmul.f32 %v1475, %v1461
        %v1490 = vmul.f32 %v1481, %v1462
        %v1491 = vmul.f32 %v1487, %v1463
        %v1492 = vsel %vm560, %v1488, 0.0
        %v1493 = vsel %vm560, %v1489, 0.0
        %v1494 = vadd.f32 %v1492, %v1493
        %v1495 = vrot.slane %v1494, 4
        %v1496 = vadd.f32 %v1494, %v1495
        %v1497 = vrot.slane %v1496, 2
        %v1498 = vadd.f32 %v1496, %v1497
        %v1499 = vrot.slane %v1498, 1
        %v1500 = vadd.f32 %v1498, %v1499
        %v1501 = vsel %vm560, %v1490, 0.0
        %v1502 = vsel %vm560, %v1491, 0.0
        %v1503 = vadd.f32 %v1501, %v1502
        %v1504 = vrot.slane %v1503, 4
        %v1505 = vadd.f32 %v1503, %v1504
        %v1506 = vrot.slane %v1505, 2
        %v1507 = vadd.f32 %v1505, %v1506
        %v1508 = vrot.slane %v1507, 1
        %v1509 = vadd.f32 %v1507, %v1508
        %vm1512 = vcmask 1041409
        %v1513 = vsel %vm1512, %v1131, %v1122
        %vm1517 = vcmask 1043459
        %v1518 = vsel %vm1517, %v1185, %v1176
        %vm1522 = vcmask 1045509
        %v1523 = vsel %vm1522, %v1239, %v1230
        %vm1527 = vcmask 1047559
        %v1528 = vsel %vm1527, %v1293, %v1284
        %v1532 = vsel %vm1512, %v1347, %v1338
        %v1536 = vsel %vm1517, %v1401, %v1392
        %v1540 = vsel %vm1522, %v1455, %v1446
        %v1544 = vsel %vm1527, %v1509, %v1500
        %vm1546 = vcmask 1041408
        %v1547 = vsel %vm1546, %v1513, %v1518
        %v1548 = vsel %vm471, %v1547, %v1523
        %v1549 = vsel %vm431, %v1548, %v1528
        %v1550 = vsel %vm1546, %v1532, %v1536
        %v1551 = vsel %vm471, %v1550, %v1540
        %v1552 = vsel %vm431, %v1551, %v1544
        %v1553 = vld [vmem:[%s8] sm:$0x1]
        %v1555 = vperm.slane %v1553, 0
        %v1557 = vmul.f32 %v525, %v1555
        %v1558 = vmul.f32 %v526, %v1555
        %v1559 = vadd.f32 %v1549, %v1557
        %v1560 = vadd.f32 %v1552, %v1558
        %v1561 = vsub.f32 0.0, %v425
        %v1562 = vsub.f32 0.0, %v427
        %v1563 = vmul.f32 %v1561, 1.442695
        %v1564 = vpow.pop %v1563
        %v1565 = vmul.f32 %v1562, 1.442695
        %v1566 = vpow.pop %v1565
        %v1567 = vadd.f32 %v1564, 1.0
        %v1568 = vadd.f32 %v1566, 1.0
        %v1569 = vrcp.pop %v1567
        %v1570 = vmul.f32 %v1567, %v1569
        %v1571 = vsub.f32 1.0, %v1570
        %v1572 = vmul.f32 %v1569, %v1571
        %v1573 = vadd.f32 %v1569, %v1572
        %vm1574 = vweird.f32 %v1567
        %vm1575 = vweird.f32 %v1569
        %vm1576 = vmor %vm1574, %vm1575
        %v1577 = vsel %vm1576, %v1569, %v1573
        %v1578 = vand.u32 2147483647, %v1567
        %vm1579 = vcmp.eq.f32.partialorder %v1578, 8.507059e+37
        %v1580 = vand.u32 %v1567, 2147483648
        %v1581 = vor.u32 1.1754944e-38, %v1580
        %v1582 = vsel %vm1579, %v1581, %v1577
        %v1583 = vmul.f32 1.0, %v1582
        %v1584 = vrcp.pop %v1568
        %v1585 = vmul.f32 %v1568, %v1584
        %v1586 = vsub.f32 1.0, %v1585
        %v1587 = vmul.f32 %v1584, %v1586
        %v1588 = vadd.f32 %v1584, %v1587
        %vm1589 = vweird.f32 %v1568
        %vm1590 = vweird.f32 %v1584
        %vm1591 = vmor %vm1589, %vm1590
        %v1592 = vsel %vm1591, %v1584, %v1588
        %v1593 = vand.u32 2147483647, %v1568
        %vm1594 = vcmp.eq.f32.partialorder %v1593, 8.507059e+37
        %v1595 = vand.u32 %v1568, 2147483648
        %v1596 = vor.u32 1.1754944e-38, %v1595
        %v1597 = vsel %vm1594, %v1596, %v1592
        %v1598 = vmul.f32 1.0, %v1597
        %v1599 = vmul.f32 %v425, %v1583
        %v1600 = vmul.f32 %v427, %v1598
        %1603 = vrot.lane.b32.xlu0 %v1599, 64
        %v1604 = vpop.permute.xlu0 %1603
        %1605 = vrot.lane.b32.xlu0 %v1600, 64
        %v1606 = vpop.permute.xlu0 %1605
        %v1609 = vmul.f32 %v1559, %v1604
        %v1610 = vmul.f32 %v1560, %v1606
        %v1611 = vpack.c.bf16 %v1610, %v1609
        %v1612 = vld [vmem:[%s9] sm:$0xf]
        %v1613 = vld [vmem:[%s9 + $0x4] sm:$0xf]
        %v1614 = vld [vmem:[%s9 + $0x8] sm:$0xf]
        %v1615 = vld [vmem:[%s9 + $0xc] sm:$0xf]
        %v1616 = vld [vmem:[%s9 + $0x10] sm:$0xf]
        %v1617 = vld [vmem:[%s9 + $0x14] sm:$0xf]
        %v1618 = vld [vmem:[%s9 + $0x18] sm:$0xf]
        %v1619 = vld [vmem:[%s9 + $0x1c] sm:$0xf]
        %v1628 = vunpack.c.l.b16 %v1612
        %v1629 = vunpack.c.l.b16 %v1613
        %v1630 = vunpack.c.l.b16 %v1614
        %v1631 = vunpack.c.l.b16 %v1615
        %v1632 = vunpack.c.l.b16 %v1616
        %v1633 = vunpack.c.l.b16 %v1617
        %v1634 = vunpack.c.l.b16 %v1618
        %v1635 = vunpack.c.l.b16 %v1619
        %v1636 = vpack.c.b16 %v1629, %v1628
        %v1637 = vpack.c.b16 %v1631, %v1630
        %v1638 = vpack.c.b16 %v1633, %v1632
        %v1639 = vpack.c.b16 %v1635, %v1634
        %v1645 = vsel %vm560, %v1611, 0
        %1647 = vmatpush.bf16.msra.mxu0 0
        %1648 = vmatpush.bf16.msra.mxu0 0
        %1649 = vmatpush.bf16.msra.mxu0 0
        %1650 = vmatpush.bf16.msra.mxu0 0
        %1651 = vmatpush.bf16.msra.mxu0 %v1639
        %1652 = vmatpush.bf16.msra.mxu0 %v1638
        %1653 = vmatpush.bf16.msra.mxu0 %v1637
        %1654 = vmatpush.bf16.msra.mxu0 %v1636
        %1655 = vmatmul.bf16.gmra.mxu0 %v1645
        %v1656 = vpop.f32.mrf.mxu0
        %v1657 = vadd.f32 0.0, %v1656
        %v1658 = vpop.f32.mrf.mxu0
        %v1659 = vadd.f32 0.0, %v1658
        %1660 = vdwg.mxu0
        %v1663 = vrot.slane %v1657, 2
        %v1664 = vrot.slane %v1657, 4
        %v1665 = vrot.slane %v1657, 6
        %v1666 = vrot.slane %v1659, 2
        %v1667 = vrot.slane %v1659, 4
        %v1668 = vrot.slane %v1659, 6
        %vm1675 = vcmask 254976
        %1676 = vst.msk [vmem:[%s352] sm:$0x3] %vm1675, %v1657
        %1677 = vst.msk [vmem:[%s352 + $0x2] sm:$0x3] %vm1675, %v1663
        %1678 = vst.msk [vmem:[%s352 + $0x4] sm:$0x3] %vm1675, %v1664
        %1679 = vst.msk [vmem:[%s352 + $0x6] sm:$0x3] %vm1675, %v1665
        %1680 = vst.msk [vmem:[%s352 + $0x8] sm:$0x3] %vm1675, %v1659
        %1681 = vst.msk [vmem:[%s352 + $0xa] sm:$0x3] %vm1675, %v1666
        %1682 = vst.msk [vmem:[%s352 + $0xc] sm:$0x3] %vm1675, %v1667
        %1683 = vst.msk [vmem:[%s352 + $0xe] sm:$0x3] %vm1675, %v1668
        %s1684 = sand.u32 %s247, 1
        %s1685 = scalar_lea.sflag [#allocation3], %s1684
        %s1686 = sand.u32 %s247, 1
        %s1687 = smul.addr %s1686, 16
        %s1688 = scalar_lea.vmem [#allocation2], %s1687
        // Predicated region
        $region61: #{tpu_custom_call.1} parent=59 // pred_check
          %p1689 = pneg %p257
        $region62: #{tpu_custom_call.1} parent=59 // pred_check_branch
          %1691 = sbr.rel (%p1689) target = $region64
        $region63: #{tpu_custom_call.1} parent=59 // pred_region
          %1693 = vsyncadd %s1685, 0
          %s1694 = smul.addr %s24, 8
          %s1695 = smul.addr %s1694, 2
          %s1696 = scalar_lea.hbm %s10, %s1695
          %s1697 = sshll.u32 %s1688, 4
          %s1698 = int_to_ptr.vmem [resolvable:$true] %s1697
          %s1699 = sshll.u32 %s1696, 4
          %s1700 = int_to_ptr.hbm [resolvable:$true] %s1699
          %1705 = dma.vmem_to_hbm [thread:$0]  %s1698, 256, %s1700, %s1685, 32, 32, 2
        $region64: #{tpu_custom_call.1} parent=59 // pred_fallthru
          _
      $region60: #{tpu_custom_call.1} parent=5 // pred_fallthru
        _
      %p1706 = scmp.le.s32.totalorder 2, %s19
      // Predicated region
      $region65: #{tpu_custom_call.1} parent=5 // pred_check
        %p1707 = pneg %p1706
      $region66: #{tpu_custom_call.1} parent=5 // pred_check_branch
        %1709 = sbr.rel (%p1707) target = $region68
      $region67: #{tpu_custom_call.1} parent=5 // pred_region
        %s1710 = ssub.s32 %s19, 2
        // Predicated region
        $region69: #{tpu_custom_call.1} parent=67 // pred_check
          %p1711 = pneg %p263
        $region70: #{tpu_custom_call.1} parent=67 // pred_check_branch
          %1713 = sbr.rel (%p1711) target = $region72
        $region71: #{tpu_custom_call.1} parent=67 // pred_region
          %s1714 = sand.u32 %s248, 1
          %s1715 = scalar_lea.sflag [#allocation3], %s1714
          %s1716 = sand.u32 %s248, 1
          %s1717 = smul.addr %s1716, 16
          %s1718 = scalar_lea.vmem [#allocation2], %s1717
          %1720 = dma.done %s1715, 256
        $region72: #{tpu_custom_call.1} parent=67 // pred_fallthru
          _
      $region68: #{tpu_custom_call.1} parent=5 // pred_fallthru
        _
    $region6: #{tpu_custom_call.1} parent=1 // loop_footer
      %s23 = sadd.s32 1, %s19
    $region7: #{tpu_custom_call.1} parent=1 // loop_footer_branch
      %18 = sbr.rel target = $region3
    $region8: #{tpu_custom_call.1} parent=1 // loop_exit
      _
    %1721 = vsyncpa [#allocation3], 1
    %s1722 = scalar_lea.sflag [#allocation3], 1
    %1723 = vsyncpa %s1722, 1

</llo_original>
